<compile_context>
chip_gen: v7x
topology: tpu7x:2x2x1
jax: 0.10.0
libtpu: 0.0.40
codegen_flags: <defaults>
</compile_context>

<pallas_src>
import jax
import jax.numpy as jnp
from jax import lax
from jax.experimental import pallas as pl
from jax.experimental.pallas import tpu as pltpu


# ------------------------- fused LSTM(+layers) + FC kernel -------------------------
def make_fused_kernel(num_layers, T, B, H):
    def kernel(*refs):
        x_ref = refs[0]                                   # (T*B, D_in) time-major flat
        layer_refs = refs[1:1 + 3 * num_layers]           # (w_ih, w_hh, b) per layer
        fc_w_ref = refs[1 + 3 * num_layers]                # (H, O)
        fc_b_ref = refs[2 + 3 * num_layers]                # (1, O)
        out_ref = refs[3 + 3 * num_layers]                 # (B, O)

        # Current layer input, time-major and flattened: row index = t*B + b.
        x_flat = x_ref[...].astype(jnp.float32)

        h = None
        for layer in range(num_layers):
            w_ih = layer_refs[3 * layer][...]              # (D_in, 4H)
            w_hh = layer_refs[3 * layer + 1][...]          # (H, 4H)
            b = layer_refs[3 * layer + 2][...]             # (1, 4H)

            # Hoisted input projection: one big matmul over all timesteps at once.
            xw = jnp.dot(x_flat, w_ih,
                         preferred_element_type=jnp.float32) + b        # (T*B, 4H)

            h = jnp.zeros((B, H), jnp.float32)
            c = jnp.zeros((B, H), jnp.float32)
            hs = []
            for t in range(T):                             # static, fully unrolled
                gates = xw[t * B:(t + 1) * B, :] + jnp.dot(
                    h, w_hh, preferred_element_type=jnp.float32)        # (B, 4H)
                i_g = jax.nn.sigmoid(gates[:, 0:H])
                f_g = jax.nn.sigmoid(gates[:, H:2 * H])
                g_g = jnp.tanh(gates[:, 2 * H:3 * H])
                o_g = jax.nn.sigmoid(gates[:, 3 * H:4 * H])
                c = f_g * c + i_g * g_g
                h = o_g * jnp.tanh(c)
                if layer + 1 < num_layers:
                    hs.append(h)
            if layer + 1 < num_layers:
                # Next layer consumes the full hidden sequence; it never touches HBM.
                x_flat = jnp.concatenate(hs, axis=0)       # (T*B, H), time-major
            # TODO(synk): PyTorch applies inter-layer LSTM dropout (and the explicit
            # Dropout before fc) only in training mode; eval-mode dropout is identity.

        # Final Linear fused into the same kernel: only the last hidden state is needed.
        out_ref[...] = (jnp.dot(h, fc_w_ref[...],
                                preferred_element_type=jnp.float32)
                        + fc_b_ref[...]).astype(out_ref.dtype)

    return kernel


# ----------------------------------- wrapper ---------------------------------------
def lstm_model_forward(x_btd, params):
    """x_btd: (B, T, input_dim), batch_first like the PyTorch module."""
    B, T, D = x_btd.shape
    H = params["lstm"][0][1].shape[0]
    O = params["fc_w"].shape[1]
    num_layers = len(params["lstm"])

    # Layout plumbing in the wrapper: time-major, flattened to (T*B, D) so the kernel's
    # hoisted input projection is a single large matmul.
    x_flat = jnp.transpose(x_btd, (1, 0, 2)).reshape(T * B, D)

    flat_weights = []
    for (w_ih, w_hh, b) in params["lstm"]:
        flat_weights += [w_ih, w_hh, b]
    inputs = [x_flat] + flat_weights + [params["fc_w"], params["fc_b"].reshape(1, O)]

    vmem_spec = pl.BlockSpec(memory_space=pltpu.MemorySpace.VMEM)
    return pl.pallas_call(
        make_fused_kernel(num_layers, T, B, H),
        out_shape=jax.ShapeDtypeStruct((B, O), x_btd.dtype),
        in_specs=[vmem_spec] * len(inputs),
        out_specs=vmem_spec,
        compiler_params=pltpu.CompilerParams(vmem_limit_bytes=64 * 1024 * 1024),
    )(*inputs)


# --------------------------- deterministic param init ------------------------------
def init_params(key, input_dim, hidden_dim, num_layers, output_dim):
    bound = 1.0 / jnp.sqrt(hidden_dim)
    params = {"lstm": []}
    for layer in range(num_layers):
        in_dim = input_dim if layer == 0 else hidden_dim
        key, k1, k2, k3, k4 = jax.random.split(key, 5)
        w_ih = jax.random.uniform(k1, (in_dim, 4 * hidden_dim),
                                  jnp.float32, -bound, bound)
        w_hh = jax.random.uniform(k2, (hidden_dim, 4 * hidden_dim),
                                  jnp.float32, -bound, bound)
        b_ih = jax.random.uniform(k3, (4 * hidden_dim,), jnp.float32, -bound, bound)
        b_hh = jax.random.uniform(k4, (4 * hidden_dim,), jnp.float32, -bound, bound)
        params["lstm"].append((w_ih, w_hh, (b_ih + b_hh).reshape(1, -1)))
    key, k5, k6 = jax.random.split(key, 3)
    fb = 1.0 / jnp.sqrt(hidden_dim)
    params["fc_w"] = jax.random.uniform(k5, (hidden_dim, output_dim),
                                        jnp.float32, -fb, fb)
    params["fc_b"] = jax.random.uniform(k6, (output_dim,), jnp.float32, -fb, fb)
    return params


# ------------------------------ pure-JAX reference ----------------------------------
def reference_forward(x_btd, params):
    x = jnp.transpose(x_btd, (1, 0, 2))
    for (w_ih, w_hh, b) in params["lstm"]:
        B = x.shape[1]
        H = w_hh.shape[0]

        def step(carry, x_t):
            h, c = carry
            g = x_t @ w_ih + h @ w_hh + b[0]
            i = jax.nn.sigmoid(g[:, :H])
            f = jax.nn.sigmoid(g[:, H:2 * H])
            gg = jnp.tanh(g[:, 2 * H:3 * H])
            o = jax.nn.sigmoid(g[:, 3 * H:])
            c = f * c + i * gg
            h = o * jnp.tanh(c)
            return (h, c), h

        init = (jnp.zeros((B, H), jnp.float32), jnp.zeros((B, H), jnp.float32))
        _, x = lax.scan(step, init, x)
    return x[-1] @ params["fc_w"] + params["fc_b"]


if __name__ == "__main__":
    # Small shapes consistent with the module's forward.
    batch, seq_len = 8, 8
    input_dim, hidden_dim, num_layers, output_dim = 16, 32, 2, 4

    key = jax.random.PRNGKey(0)
    key, kx, kp = jax.random.split(key, 3)
    x = jax.random.normal(kx, (batch, seq_len, input_dim), jnp.float32)
    params = init_params(kp, input_dim, hidden_dim, num_layers, output_dim)

    out = lstm_model_forward(x, params)
    out = jax.block_until_ready(out)

    ref = reference_forward(x, params)
    assert out.shape == (batch, output_dim)
    assert jnp.allclose(out, ref, atol=1e-4, rtol=1e-4), "mismatch vs reference"

    print("KERNEL_OK")
</pallas_src>

<mosaic_0001>
module attributes {stable_mosaic.version = 11 : i64} {
  func.func @kernel(%arg0: memref<64x16xf32, #tpu.memory_space<vmem>>, %arg1: memref<16x128xf32, #tpu.memory_space<vmem>>, %arg2: memref<32x128xf32, #tpu.memory_space<vmem>>, %arg3: memref<1x128xf32, #tpu.memory_space<vmem>>, %arg4: memref<32x128xf32, #tpu.memory_space<vmem>>, %arg5: memref<32x128xf32, #tpu.memory_space<vmem>>, %arg6: memref<1x128xf32, #tpu.memory_space<vmem>>, %arg7: memref<32x4xf32, #tpu.memory_space<vmem>>, %arg8: memref<1x4xf32, #tpu.memory_space<vmem>>, %arg9: memref<8x4xf32, #tpu.memory_space<vmem>>) attributes {dimension_semantics = [], scalar_prefetch = 0 : i64, scratch_operands = 0 : i64, tpu.core_type = #tpu.core_type<tc>} {
    %c0 = arith.constant 0 : index
    %c0_0 = arith.constant 0 : index
    %0 = vector.load %arg0[%c0, %c0_0] : memref<64x16xf32, #tpu.memory_space<vmem>>, vector<64x16xf32>
    %c0_1 = arith.constant 0 : index
    %c0_2 = arith.constant 0 : index
    %1 = vector.load %arg1[%c0_1, %c0_2] : memref<16x128xf32, #tpu.memory_space<vmem>>, vector<16x128xf32>
    %c0_3 = arith.constant 0 : index
    %c0_4 = arith.constant 0 : index
    %2 = vector.load %arg2[%c0_3, %c0_4] : memref<32x128xf32, #tpu.memory_space<vmem>>, vector<32x128xf32>
    %c0_5 = arith.constant 0 : index
    %c0_6 = arith.constant 0 : index
    %3 = vector.load %arg3[%c0_5, %c0_6] : memref<1x128xf32, #tpu.memory_space<vmem>>, vector<1x128xf32>
    %cst = arith.constant dense<0.000000e+00> : vector<64x128xf32>
    %4 = tpu.matmul %0, %1, %cst {dimension_numbers = #tpu.dot_dimension_numbers<[1], [0], [0], [1], [0, 0, 1, 1], [], []>} : vector<64x16xf32>, vector<16x128xf32>, vector<64x128xf32> -> vector<64x128xf32>
    %5 = vector.broadcast %3 : vector<1x128xf32> to vector<64x128xf32>
    %6 = arith.addf %4, %5 : vector<64x128xf32>
    %cst_7 = arith.constant 0.000000e+00 : f32
    %7 = vector.broadcast %cst_7 : f32 to vector<8x32xf32>
    %cst_8 = arith.constant 0.000000e+00 : f32
    %8 = vector.broadcast %cst_8 : f32 to vector<8x32xf32>
    %9 = vector.extract_strided_slice %6 {offsets = [0, 0], sizes = [8, 128], strides = [1, 1]} : vector<64x128xf32> to vector<8x128xf32>
    %cst_9 = arith.constant dense<0.000000e+00> : vector<8x128xf32>
    %10 = tpu.matmul %7, %2, %cst_9 {dimension_numbers = #tpu.dot_dimension_numbers<[1], [0], [0], [1], [0, 0, 1, 1], [], []>} : vector<8x32xf32>, vector<32x128xf32>, vector<8x128xf32> -> vector<8x128xf32>
    %11 = arith.addf %9, %10 : vector<8x128xf32>
    %12 = vector.extract_strided_slice %11 {offsets = [0, 0], sizes = [8, 32], strides = [1, 1]} : vector<8x128xf32> to vector<8x32xf32>
    %13 = arith.negf %12 : vector<8x32xf32>
    %14 = math.exp %13 : vector<8x32xf32>
    %cst_10 = arith.constant 1.000000e+00 : f32
    %15 = vector.broadcast %cst_10 : f32 to vector<8x32xf32>
    %16 = arith.addf %15, %14 : vector<8x32xf32>
    %17 = arith.divf %15, %16 : vector<8x32xf32>
    %18 = vector.extract_strided_slice %11 {offsets = [0, 32], sizes = [8, 32], strides = [1, 1]} : vector<8x128xf32> to vector<8x32xf32>
    %19 = arith.negf %18 : vector<8x32xf32>
    %20 = math.exp %19 : vector<8x32xf32>
    %cst_11 = arith.constant 1.000000e+00 : f32
    %21 = vector.broadcast %cst_11 : f32 to vector<8x32xf32>
    %22 = arith.addf %21, %20 : vector<8x32xf32>
    %23 = arith.divf %21, %22 : vector<8x32xf32>
    %24 = vector.extract_strided_slice %11 {offsets = [0, 64], sizes = [8, 32], strides = [1, 1]} : vector<8x128xf32> to vector<8x32xf32>
    %25 = math.tanh %24 : vector<8x32xf32>
    %26 = vector.extract_strided_slice %11 {offsets = [0, 96], sizes = [8, 32], strides = [1, 1]} : vector<8x128xf32> to vector<8x32xf32>
    %27 = arith.negf %26 : vector<8x32xf32>
    %28 = math.exp %27 : vector<8x32xf32>
    %cst_12 = arith.constant 1.000000e+00 : f32
    %29 = vector.broadcast %cst_12 : f32 to vector<8x32xf32>
    %30 = arith.addf %29, %28 : vector<8x32xf32>
    %31 = arith.divf %29, %30 : vector<8x32xf32>
    %32 = arith.mulf %23, %8 : vector<8x32xf32>
    %33 = arith.mulf %17, %25 : vector<8x32xf32>
    %34 = arith.addf %32, %33 : vector<8x32xf32>
    %35 = math.tanh %34 : vector<8x32xf32>
    %36 = arith.mulf %31, %35 : vector<8x32xf32>
    %37 = vector.extract_strided_slice %6 {offsets = [8, 0], sizes = [8, 128], strides = [1, 1]} : vector<64x128xf32> to vector<8x128xf32>
    %cst_13 = arith.constant dense<0.000000e+00> : vector<8x128xf32>
    %38 = tpu.matmul %36, %2, %cst_13 {dimension_numbers = #tpu.dot_dimension_numbers<[1], [0], [0], [1], [0, 0, 1, 1], [], []>} : vector<8x32xf32>, vector<32x128xf32>, vector<8x128xf32> -> vector<8x128xf32>
    %39 = arith.addf %37, %38 : vector<8x128xf32>
    %40 = vector.extract_strided_slice %39 {offsets = [0, 0], sizes = [8, 32], strides = [1, 1]} : vector<8x128xf32> to vector<8x32xf32>
    %41 = arith.negf %40 : vector<8x32xf32>
    %42 = math.exp %41 : vector<8x32xf32>
    %cst_14 = arith.constant 1.000000e+00 : f32
    %43 = vector.broadcast %cst_14 : f32 to vector<8x32xf32>
    %44 = arith.addf %43, %42 : vector<8x32xf32>
    %45 = arith.divf %43, %44 : vector<8x32xf32>
    %46 = vector.extract_strided_slice %39 {offsets = [0, 32], sizes = [8, 32], strides = [1, 1]} : vector<8x128xf32> to vector<8x32xf32>
    %47 = arith.negf %46 : vector<8x32xf32>
    %48 = math.exp %47 : vector<8x32xf32>
    %cst_15 = arith.constant 1.000000e+00 : f32
    %49 = vector.broadcast %cst_15 : f32 to vector<8x32xf32>
    %50 = arith.addf %49, %48 : vector<8x32xf32>
    %51 = arith.divf %49, %50 : vector<8x32xf32>
    %52 = vector.extract_strided_slice %39 {offsets = [0, 64], sizes = [8, 32], strides = [1, 1]} : vector<8x128xf32> to vector<8x32xf32>
    %53 = math.tanh %52 : vector<8x32xf32>
    %54 = vector.extract_strided_slice %39 {offsets = [0, 96], sizes = [8, 32], strides = [1, 1]} : vector<8x128xf32> to vector<8x32xf32>
    %55 = arith.negf %54 : vector<8x32xf32>
    %56 = math.exp %55 : vector<8x32xf32>
    %cst_16 = arith.constant 1.000000e+00 : f32
    %57 = vector.broadcast %cst_16 : f32 to vector<8x32xf32>
    %58 = arith.addf %57, %56 : vector<8x32xf32>
    %59 = arith.divf %57, %58 : vector<8x32xf32>
    %60 = arith.mulf %51, %34 : vector<8x32xf32>
    %61 = arith.mulf %45, %53 : vector<8x32xf32>
    %62 = arith.addf %60, %61 : vector<8x32xf32>
    %63 = math.tanh %62 : vector<8x32xf32>
    %64 = arith.mulf %59, %63 : vector<8x32xf32>
    %65 = vector.extract_strided_slice %6 {offsets = [16, 0], sizes = [8, 128], strides = [1, 1]} : vector<64x128xf32> to vector<8x128xf32>
    %cst_17 = arith.constant dense<0.000000e+00> : vector<8x128xf32>
    %66 = tpu.matmul %64, %2, %cst_17 {dimension_numbers = #tpu.dot_dimension_numbers<[1], [0], [0], [1], [0, 0, 1, 1], [], []>} : vector<8x32xf32>, vector<32x128xf32>, vector<8x128xf32> -> vector<8x128xf32>
    %67 = arith.addf %65, %66 : vector<8x128xf32>
    %68 = vector.extract_strided_slice %67 {offsets = [0, 0], sizes = [8, 32], strides = [1, 1]} : vector<8x128xf32> to vector<8x32xf32>
    %69 = arith.negf %68 : vector<8x32xf32>
    %70 = math.exp %69 : vector<8x32xf32>
    %cst_18 = arith.constant 1.000000e+00 : f32
    %71 = vector.broadcast %cst_18 : f32 to vector<8x32xf32>
    %72 = arith.addf %71, %70 : vector<8x32xf32>
    %73 = arith.divf %71, %72 : vector<8x32xf32>
    %74 = vector.extract_strided_slice %67 {offsets = [0, 32], sizes = [8, 32], strides = [1, 1]} : vector<8x128xf32> to vector<8x32xf32>
    %75 = arith.negf %74 : vector<8x32xf32>
    %76 = math.exp %75 : vector<8x32xf32>
    %cst_19 = arith.constant 1.000000e+00 : f32
    %77 = vector.broadcast %cst_19 : f32 to vector<8x32xf32>
    %78 = arith.addf %77, %76 : vector<8x32xf32>
    %79 = arith.divf %77, %78 : vector<8x32xf32>
    %80 = vector.extract_strided_slice %67 {offsets = [0, 64], sizes = [8, 32], strides = [1, 1]} : vector<8x128xf32> to vector<8x32xf32>
    %81 = math.tanh %80 : vector<8x32xf32>
    %82 = vector.extract_strided_slice %67 {offsets = [0, 96], sizes = [8, 32], strides = [1, 1]} : vector<8x128xf32> to vector<8x32xf32>
    %83 = arith.negf %82 : vector<8x32xf32>
    %84 = math.exp %83 : vector<8x32xf32>
    %cst_20 = arith.constant 1.000000e+00 : f32
    %85 = vector.broadcast %cst_20 : f32 to vector<8x32xf32>
    %86 = arith.addf %85, %84 : vector<8x32xf32>
    %87 = arith.divf %85, %86 : vector<8x32xf32>
    %88 = arith.mulf %79, %62 : vector<8x32xf32>
    %89 = arith.mulf %73, %81 : vector<8x32xf32>
    %90 = arith.addf %88, %89 : vector<8x32xf32>
    %91 = math.tanh %90 : vector<8x32xf32>
    %92 = arith.mulf %87, %91 : vector<8x32xf32>
    %93 = vector.extract_strided_slice %6 {offsets = [24, 0], sizes = [8, 128], strides = [1, 1]} : vector<64x128xf32> to vector<8x128xf32>
    %cst_21 = arith.constant dense<0.000000e+00> : vector<8x128xf32>
    %94 = tpu.matmul %92, %2, %cst_21 {dimension_numbers = #tpu.dot_dimension_numbers<[1], [0], [0], [1], [0, 0, 1, 1], [], []>} : vector<8x32xf32>, vector<32x128xf32>, vector<8x128xf32> -> vector<8x128xf32>
    %95 = arith.addf %93, %94 : vector<8x128xf32>
    %96 = vector.extract_strided_slice %95 {offsets = [0, 0], sizes = [8, 32], strides = [1, 1]} : vector<8x128xf32> to vector<8x32xf32>
    %97 = arith.negf %96 : vector<8x32xf32>
    %98 = math.exp %97 : vector<8x32xf32>
    %cst_22 = arith.constant 1.000000e+00 : f32
    %99 = vector.broadcast %cst_22 : f32 to vector<8x32xf32>
    %100 = arith.addf %99, %98 : vector<8x32xf32>
    %101 = arith.divf %99, %100 : vector<8x32xf32>
    %102 = vector.extract_strided_slice %95 {offsets = [0, 32], sizes = [8, 32], strides = [1, 1]} : vector<8x128xf32> to vector<8x32xf32>
    %103 = arith.negf %102 : vector<8x32xf32>
    %104 = math.exp %103 : vector<8x32xf32>
    %cst_23 = arith.constant 1.000000e+00 : f32
    %105 = vector.broadcast %cst_23 : f32 to vector<8x32xf32>
    %106 = arith.addf %105, %104 : vector<8x32xf32>
    %107 = arith.divf %105, %106 : vector<8x32xf32>
    %108 = vector.extract_strided_slice %95 {offsets = [0, 64], sizes = [8, 32], strides = [1, 1]} : vector<8x128xf32> to vector<8x32xf32>
    %109 = math.tanh %108 : vector<8x32xf32>
    %110 = vector.extract_strided_slice %95 {offsets = [0, 96], sizes = [8, 32], strides = [1, 1]} : vector<8x128xf32> to vector<8x32xf32>
    %111 = arith.negf %110 : vector<8x32xf32>
    %112 = math.exp %111 : vector<8x32xf32>
    %cst_24 = arith.constant 1.000000e+00 : f32
    %113 = vector.broadcast %cst_24 : f32 to vector<8x32xf32>
    %114 = arith.addf %113, %112 : vector<8x32xf32>
    %115 = arith.divf %113, %114 : vector<8x32xf32>
    %116 = arith.mulf %107, %90 : vector<8x32xf32>
    %117 = arith.mulf %101, %109 : vector<8x32xf32>
    %118 = arith.addf %116, %117 : vector<8x32xf32>
    %119 = math.tanh %118 : vector<8x32xf32>
    %120 = arith.mulf %115, %119 : vector<8x32xf32>
    %121 = vector.extract_strided_slice %6 {offsets = [32, 0], sizes = [8, 128], strides = [1, 1]} : vector<64x128xf32> to vector<8x128xf32>
    %cst_25 = arith.constant dense<0.000000e+00> : vector<8x128xf32>
    %122 = tpu.matmul %120, %2, %cst_25 {dimension_numbers = #tpu.dot_dimension_numbers<[1], [0], [0], [1], [0, 0, 1, 1], [], []>} : vector<8x32xf32>, vector<32x128xf32>, vector<8x128xf32> -> vector<8x128xf32>
    %123 = arith.addf %121, %122 : vector<8x128xf32>
    %124 = vector.extract_strided_slice %123 {offsets = [0, 0], sizes = [8, 32], strides = [1, 1]} : vector<8x128xf32> to vector<8x32xf32>
    %125 = arith.negf %124 : vector<8x32xf32>
    %126 = math.exp %125 : vector<8x32xf32>
    %cst_26 = arith.constant 1.000000e+00 : f32
    %127 = vector.broadcast %cst_26 : f32 to vector<8x32xf32>
    %128 = arith.addf %127, %126 : vector<8x32xf32>
    %129 = arith.divf %127, %128 : vector<8x32xf32>
    %130 = vector.extract_strided_slice %123 {offsets = [0, 32], sizes = [8, 32], strides = [1, 1]} : vector<8x128xf32> to vector<8x32xf32>
    %131 = arith.negf %130 : vector<8x32xf32>
    %132 = math.exp %131 : vector<8x32xf32>
    %cst_27 = arith.constant 1.000000e+00 : f32
    %133 = vector.broadcast %cst_27 : f32 to vector<8x32xf32>
    %134 = arith.addf %133, %132 : vector<8x32xf32>
    %135 = arith.divf %133, %134 : vector<8x32xf32>
    %136 = vector.extract_strided_slice %123 {offsets = [0, 64], sizes = [8, 32], strides = [1, 1]} : vector<8x128xf32> to vector<8x32xf32>
    %137 = math.tanh %136 : vector<8x32xf32>
    %138 = vector.extract_strided_slice %123 {offsets = [0, 96], sizes = [8, 32], strides = [1, 1]} : vector<8x128xf32> to vector<8x32xf32>
    %139 = arith.negf %138 : vector<8x32xf32>
    %140 = math.exp %139 : vector<8x32xf32>
    %cst_28 = arith.constant 1.000000e+00 : f32
    %141 = vector.broadcast %cst_28 : f32 to vector<8x32xf32>
    %142 = arith.addf %141, %140 : vector<8x32xf32>
    %143 = arith.divf %141, %142 : vector<8x32xf32>
    %144 = arith.mulf %135, %118 : vector<8x32xf32>
    %145 = arith.mulf %129, %137 : vector<8x32xf32>
    %146 = arith.addf %144, %145 : vector<8x32xf32>
    %147 = math.tanh %146 : vector<8x32xf32>
    %148 = arith.mulf %143, %147 : vector<8x32xf32>
    %149 = vector.extract_strided_slice %6 {offsets = [40, 0], sizes = [8, 128], strides = [1, 1]} : vector<64x128xf32> to vector<8x128xf32>
    %cst_29 = arith.constant dense<0.000000e+00> : vector<8x128xf32>
    %150 = tpu.matmul %148, %2, %cst_29 {dimension_numbers = #tpu.dot_dimension_numbers<[1], [0], [0], [1], [0, 0, 1, 1], [], []>} : vector<8x32xf32>, vector<32x128xf32>, vector<8x128xf32> -> vector<8x128xf32>
    %151 = arith.addf %149, %150 : vector<8x128xf32>
    %152 = vector.extract_strided_slice %151 {offsets = [0, 0], sizes = [8, 32], strides = [1, 1]} : vector<8x128xf32> to vector<8x32xf32>
    %153 = arith.negf %152 : vector<8x32xf32>
    %154 = math.exp %153 : vector<8x32xf32>
    %cst_30 = arith.constant 1.000000e+00 : f32
    %155 = vector.broadcast %cst_30 : f32 to vector<8x32xf32>
    %156 = arith.addf %155, %154 : vector<8x32xf32>
    %157 = arith.divf %155, %156 : vector<8x32xf32>
    %158 = vector.extract_strided_slice %151 {offsets = [0, 32], sizes = [8, 32], strides = [1, 1]} : vector<8x128xf32> to vector<8x32xf32>
    %159 = arith.negf %158 : vector<8x32xf32>
    %160 = math.exp %159 : vector<8x32xf32>
    %cst_31 = arith.constant 1.000000e+00 : f32
    %161 = vector.broadcast %cst_31 : f32 to vector<8x32xf32>
    %162 = arith.addf %161, %160 : vector<8x32xf32>
    %163 = arith.divf %161, %162 : vector<8x32xf32>
    %164 = vector.extract_strided_slice %151 {offsets = [0, 64], sizes = [8, 32], strides = [1, 1]} : vector<8x128xf32> to vector<8x32xf32>
    %165 = math.tanh %164 : vector<8x32xf32>
    %166 = vector.extract_strided_slice %151 {offsets = [0, 96], sizes = [8, 32], strides = [1, 1]} : vector<8x128xf32> to vector<8x32xf32>
    %167 = arith.negf %166 : vector<8x32xf32>
    %168 = math.exp %167 : vector<8x32xf32>
    %cst_32 = arith.constant 1.000000e+00 : f32
    %169 = vector.broadcast %cst_32 : f32 to vector<8x32xf32>
    %170 = arith.addf %169, %168 : vector<8x32xf32>
    %171 = arith.divf %169, %170 : vector<8x32xf32>
    %172 = arith.mulf %163, %146 : vector<8x32xf32>
    %173 = arith.mulf %157, %165 : vector<8x32xf32>
    %174 = arith.addf %172, %173 : vector<8x32xf32>
    %175 = math.tanh %174 : vector<8x32xf32>
    %176 = arith.mulf %171, %175 : vector<8x32xf32>
    %177 = vector.extract_strided_slice %6 {offsets = [48, 0], sizes = [8, 128], strides = [1, 1]} : vector<64x128xf32> to vector<8x128xf32>
    %cst_33 = arith.constant dense<0.000000e+00> : vector<8x128xf32>
    %178 = tpu.matmul %176, %2, %cst_33 {dimension_numbers = #tpu.dot_dimension_numbers<[1], [0], [0], [1], [0, 0, 1, 1], [], []>} : vector<8x32xf32>, vector<32x128xf32>, vector<8x128xf32> -> vector<8x128xf32>
    %179 = arith.addf %177, %178 : vector<8x128xf32>
    %180 = vector.extract_strided_slice %179 {offsets = [0, 0], sizes = [8, 32], strides = [1, 1]} : vector<8x128xf32> to vector<8x32xf32>
    %181 = arith.negf %180 : vector<8x32xf32>
    %182 = math.exp %181 : vector<8x32xf32>
    %cst_34 = arith.constant 1.000000e+00 : f32
    %183 = vector.broadcast %cst_34 : f32 to vector<8x32xf32>
    %184 = arith.addf %183, %182 : vector<8x32xf32>
    %185 = arith.divf %183, %184 : vector<8x32xf32>
    %186 = vector.extract_strided_slice %179 {offsets = [0, 32], sizes = [8, 32], strides = [1, 1]} : vector<8x128xf32> to vector<8x32xf32>
    %187 = arith.negf %186 : vector<8x32xf32>
    %188 = math.exp %187 : vector<8x32xf32>
    %cst_35 = arith.constant 1.000000e+00 : f32
    %189 = vector.broadcast %cst_35 : f32 to vector<8x32xf32>
    %190 = arith.addf %189, %188 : vector<8x32xf32>
    %191 = arith.divf %189, %190 : vector<8x32xf32>
    %192 = vector.extract_strided_slice %179 {offsets = [0, 64], sizes = [8, 32], strides = [1, 1]} : vector<8x128xf32> to vector<8x32xf32>
    %193 = math.tanh %192 : vector<8x32xf32>
    %194 = vector.extract_strided_slice %179 {offsets = [0, 96], sizes = [8, 32], strides = [1, 1]} : vector<8x128xf32> to vector<8x32xf32>
    %195 = arith.negf %194 : vector<8x32xf32>
    %196 = math.exp %195 : vector<8x32xf32>
    %cst_36 = arith.constant 1.000000e+00 : f32
    %197 = vector.broadcast %cst_36 : f32 to vector<8x32xf32>
    %198 = arith.addf %197, %196 : vector<8x32xf32>
    %199 = arith.divf %197, %198 : vector<8x32xf32>
    %200 = arith.mulf %191, %174 : vector<8x32xf32>
    %201 = arith.mulf %185, %193 : vector<8x32xf32>
    %202 = arith.addf %200, %201 : vector<8x32xf32>
    %203 = math.tanh %202 : vector<8x32xf32>
    %204 = arith.mulf %199, %203 : vector<8x32xf32>
    %205 = vector.extract_strided_slice %6 {offsets = [56, 0], sizes = [8, 128], strides = [1, 1]} : vector<64x128xf32> to vector<8x128xf32>
    %cst_37 = arith.constant dense<0.000000e+00> : vector<8x128xf32>
    %206 = tpu.matmul %204, %2, %cst_37 {dimension_numbers = #tpu.dot_dimension_numbers<[1], [0], [0], [1], [0, 0, 1, 1], [], []>} : vector<8x32xf32>, vector<32x128xf32>, vector<8x128xf32> -> vector<8x128xf32>
    %207 = arith.addf %205, %206 : vector<8x128xf32>
    %208 = vector.extract_strided_slice %207 {offsets = [0, 0], sizes = [8, 32], strides = [1, 1]} : vector<8x128xf32> to vector<8x32xf32>
    %209 = arith.negf %208 : vector<8x32xf32>
    %210 = math.exp %209 : vector<8x32xf32>
    %cst_38 = arith.constant 1.000000e+00 : f32
    %211 = vector.broadcast %cst_38 : f32 to vector<8x32xf32>
    %212 = arith.addf %211, %210 : vector<8x32xf32>
    %213 = arith.divf %211, %212 : vector<8x32xf32>
    %214 = vector.extract_strided_slice %207 {offsets = [0, 32], sizes = [8, 32], strides = [1, 1]} : vector<8x128xf32> to vector<8x32xf32>
    %215 = arith.negf %214 : vector<8x32xf32>
    %216 = math.exp %215 : vector<8x32xf32>
    %cst_39 = arith.constant 1.000000e+00 : f32
    %217 = vector.broadcast %cst_39 : f32 to vector<8x32xf32>
    %218 = arith.addf %217, %216 : vector<8x32xf32>
    %219 = arith.divf %217, %218 : vector<8x32xf32>
    %220 = vector.extract_strided_slice %207 {offsets = [0, 64], sizes = [8, 32], strides = [1, 1]} : vector<8x128xf32> to vector<8x32xf32>
    %221 = math.tanh %220 : vector<8x32xf32>
    %222 = vector.extract_strided_slice %207 {offsets = [0, 96], sizes = [8, 32], strides = [1, 1]} : vector<8x128xf32> to vector<8x32xf32>
    %223 = arith.negf %222 : vector<8x32xf32>
    %224 = math.exp %223 : vector<8x32xf32>
    %cst_40 = arith.constant 1.000000e+00 : f32
    %225 = vector.broadcast %cst_40 : f32 to vector<8x32xf32>
    %226 = arith.addf %225, %224 : vector<8x32xf32>
    %227 = arith.divf %225, %226 : vector<8x32xf32>
    %228 = arith.mulf %219, %202 : vector<8x32xf32>
    %229 = arith.mulf %213, %221 : vector<8x32xf32>
    %230 = arith.addf %228, %229 : vector<8x32xf32>
    %231 = math.tanh %230 : vector<8x32xf32>
    %232 = arith.mulf %227, %231 : vector<8x32xf32>
    %233 = tpu.concatenate %36, %64, %92, %120, %148, %176, %204, %232 in 0 : vector<8x32xf32>, vector<8x32xf32>, vector<8x32xf32>, vector<8x32xf32>, vector<8x32xf32>, vector<8x32xf32>, vector<8x32xf32>, vector<8x32xf32> -> vector<64x32xf32>
    %c0_41 = arith.constant 0 : index
    %c0_42 = arith.constant 0 : index
    %234 = vector.load %arg4[%c0_41, %c0_42] : memref<32x128xf32, #tpu.memory_space<vmem>>, vector<32x128xf32>
    %c0_43 = arith.constant 0 : index
    %c0_44 = arith.constant 0 : index
    %235 = vector.load %arg5[%c0_43, %c0_44] : memref<32x128xf32, #tpu.memory_space<vmem>>, vector<32x128xf32>
    %c0_45 = arith.constant 0 : index
    %c0_46 = arith.constant 0 : index
    %236 = vector.load %arg6[%c0_45, %c0_46] : memref<1x128xf32, #tpu.memory_space<vmem>>, vector<1x128xf32>
    %cst_47 = arith.constant dense<0.000000e+00> : vector<64x128xf32>
    %237 = tpu.matmul %233, %234, %cst_47 {dimension_numbers = #tpu.dot_dimension_numbers<[1], [0], [0], [1], [0, 0, 1, 1], [], []>} : vector<64x32xf32>, vector<32x128xf32>, vector<64x128xf32> -> vector<64x128xf32>
    %238 = vector.broadcast %236 : vector<1x128xf32> to vector<64x128xf32>
    %239 = arith.addf %237, %238 : vector<64x128xf32>
    %cst_48 = arith.constant 0.000000e+00 : f32
    %240 = vector.broadcast %cst_48 : f32 to vector<8x32xf32>
    %cst_49 = arith.constant 0.000000e+00 : f32
    %241 = vector.broadcast %cst_49 : f32 to vector<8x32xf32>
    %242 = vector.extract_strided_slice %239 {offsets = [0, 0], sizes = [8, 128], strides = [1, 1]} : vector<64x128xf32> to vector<8x128xf32>
    %cst_50 = arith.constant dense<0.000000e+00> : vector<8x128xf32>
    %243 = tpu.matmul %240, %235, %cst_50 {dimension_numbers = #tpu.dot_dimension_numbers<[1], [0], [0], [1], [0, 0, 1, 1], [], []>} : vector<8x32xf32>, vector<32x128xf32>, vector<8x128xf32> -> vector<8x128xf32>
    %244 = arith.addf %242, %243 : vector<8x128xf32>
    %245 = vector.extract_strided_slice %244 {offsets = [0, 0], sizes = [8, 32], strides = [1, 1]} : vector<8x128xf32> to vector<8x32xf32>
    %246 = arith.negf %245 : vector<8x32xf32>
    %247 = math.exp %246 : vector<8x32xf32>
    %cst_51 = arith.constant 1.000000e+00 : f32
    %248 = vector.broadcast %cst_51 : f32 to vector<8x32xf32>
    %249 = arith.addf %248, %247 : vector<8x32xf32>
    %250 = arith.divf %248, %249 : vector<8x32xf32>
    %251 = vector.extract_strided_slice %244 {offsets = [0, 32], sizes = [8, 32], strides = [1, 1]} : vector<8x128xf32> to vector<8x32xf32>
    %252 = arith.negf %251 : vector<8x32xf32>
    %253 = math.exp %252 : vector<8x32xf32>
    %cst_52 = arith.constant 1.000000e+00 : f32
    %254 = vector.broadcast %cst_52 : f32 to vector<8x32xf32>
    %255 = arith.addf %254, %253 : vector<8x32xf32>
    %256 = arith.divf %254, %255 : vector<8x32xf32>
    %257 = vector.extract_strided_slice %244 {offsets = [0, 64], sizes = [8, 32], strides = [1, 1]} : vector<8x128xf32> to vector<8x32xf32>
    %258 = math.tanh %257 : vector<8x32xf32>
    %259 = vector.extract_strided_slice %244 {offsets = [0, 96], sizes = [8, 32], strides = [1, 1]} : vector<8x128xf32> to vector<8x32xf32>
    %260 = arith.negf %259 : vector<8x32xf32>
    %261 = math.exp %260 : vector<8x32xf32>
    %cst_53 = arith.constant 1.000000e+00 : f32
    %262 = vector.broadcast %cst_53 : f32 to vector<8x32xf32>
    %263 = arith.addf %262, %261 : vector<8x32xf32>
    %264 = arith.divf %262, %263 : vector<8x32xf32>
    %265 = arith.mulf %256, %241 : vector<8x32xf32>
    %266 = arith.mulf %250, %258 : vector<8x32xf32>
    %267 = arith.addf %265, %266 : vector<8x32xf32>
    %268 = math.tanh %267 : vector<8x32xf32>
    %269 = arith.mulf %264, %268 : vector<8x32xf32>
    %270 = vector.extract_strided_slice %239 {offsets = [8, 0], sizes = [8, 128], strides = [1, 1]} : vector<64x128xf32> to vector<8x128xf32>
    %cst_54 = arith.constant dense<0.000000e+00> : vector<8x128xf32>
    %271 = tpu.matmul %269, %235, %cst_54 {dimension_numbers = #tpu.dot_dimension_numbers<[1], [0], [0], [1], [0, 0, 1, 1], [], []>} : vector<8x32xf32>, vector<32x128xf32>, vector<8x128xf32> -> vector<8x128xf32>
    %272 = arith.addf %270, %271 : vector<8x128xf32>
    %273 = vector.extract_strided_slice %272 {offsets = [0, 0], sizes = [8, 32], strides = [1, 1]} : vector<8x128xf32> to vector<8x32xf32>
    %274 = arith.negf %273 : vector<8x32xf32>
    %275 = math.exp %274 : vector<8x32xf32>
    %cst_55 = arith.constant 1.000000e+00 : f32
    %276 = vector.broadcast %cst_55 : f32 to vector<8x32xf32>
    %277 = arith.addf %276, %275 : vector<8x32xf32>
    %278 = arith.divf %276, %277 : vector<8x32xf32>
    %279 = vector.extract_strided_slice %272 {offsets = [0, 32], sizes = [8, 32], strides = [1, 1]} : vector<8x128xf32> to vector<8x32xf32>
    %280 = arith.negf %279 : vector<8x32xf32>
    %281 = math.exp %280 : vector<8x32xf32>
    %cst_56 = arith.constant 1.000000e+00 : f32
    %282 = vector.broadcast %cst_56 : f32 to vector<8x32xf32>
    %283 = arith.addf %282, %281 : vector<8x32xf32>
    %284 = arith.divf %282, %283 : vector<8x32xf32>
    %285 = vector.extract_strided_slice %272 {offsets = [0, 64], sizes = [8, 32], strides = [1, 1]} : vector<8x128xf32> to vector<8x32xf32>
    %286 = math.tanh %285 : vector<8x32xf32>
    %287 = vector.extract_strided_slice %272 {offsets = [0, 96], sizes = [8, 32], strides = [1, 1]} : vector<8x128xf32> to vector<8x32xf32>
    %288 = arith.negf %287 : vector<8x32xf32>
    %289 = math.exp %288 : vector<8x32xf32>
    %cst_57 = arith.constant 1.000000e+00 : f32
    %290 = vector.broadcast %cst_57 : f32 to vector<8x32xf32>
    %291 = arith.addf %290, %289 : vector<8x32xf32>
    %292 = arith.divf %290, %291 : vector<8x32xf32>
    %293 = arith.mulf %284, %267 : vector<8x32xf32>
    %294 = arith.mulf %278, %286 : vector<8x32xf32>
    %295 = arith.addf %293, %294 : vector<8x32xf32>
    %296 = math.tanh %295 : vector<8x32xf32>
    %297 = arith.mulf %292, %296 : vector<8x32xf32>
    %298 = vector.extract_strided_slice %239 {offsets = [16, 0], sizes = [8, 128], strides = [1, 1]} : vector<64x128xf32> to vector<8x128xf32>
    %cst_58 = arith.constant dense<0.000000e+00> : vector<8x128xf32>
    %299 = tpu.matmul %297, %235, %cst_58 {dimension_numbers = #tpu.dot_dimension_numbers<[1], [0], [0], [1], [0, 0, 1, 1], [], []>} : vector<8x32xf32>, vector<32x128xf32>, vector<8x128xf32> -> vector<8x128xf32>
    %300 = arith.addf %298, %299 : vector<8x128xf32>
    %301 = vector.extract_strided_slice %300 {offsets = [0, 0], sizes = [8, 32], strides = [1, 1]} : vector<8x128xf32> to vector<8x32xf32>
    %302 = arith.negf %301 : vector<8x32xf32>
    %303 = math.exp %302 : vector<8x32xf32>
    %cst_59 = arith.constant 1.000000e+00 : f32
    %304 = vector.broadcast %cst_59 : f32 to vector<8x32xf32>
    %305 = arith.addf %304, %303 : vector<8x32xf32>
    %306 = arith.divf %304, %305 : vector<8x32xf32>
    %307 = vector.extract_strided_slice %300 {offsets = [0, 32], sizes = [8, 32], strides = [1, 1]} : vector<8x128xf32> to vector<8x32xf32>
    %308 = arith.negf %307 : vector<8x32xf32>
    %309 = math.exp %308 : vector<8x32xf32>
    %cst_60 = arith.constant 1.000000e+00 : f32
    %310 = vector.broadcast %cst_60 : f32 to vector<8x32xf32>
    %311 = arith.addf %310, %309 : vector<8x32xf32>
    %312 = arith.divf %310, %311 : vector<8x32xf32>
    %313 = vector.extract_strided_slice %300 {offsets = [0, 64], sizes = [8, 32], strides = [1, 1]} : vector<8x128xf32> to vector<8x32xf32>
    %314 = math.tanh %313 : vector<8x32xf32>
    %315 = vector.extract_strided_slice %300 {offsets = [0, 96], sizes = [8, 32], strides = [1, 1]} : vector<8x128xf32> to vector<8x32xf32>
    %316 = arith.negf %315 : vector<8x32xf32>
    %317 = math.exp %316 : vector<8x32xf32>
    %cst_61 = arith.constant 1.000000e+00 : f32
    %318 = vector.broadcast %cst_61 : f32 to vector<8x32xf32>
    %319 = arith.addf %318, %317 : vector<8x32xf32>
    %320 = arith.divf %318, %319 : vector<8x32xf32>
    %321 = arith.mulf %312, %295 : vector<8x32xf32>
    %322 = arith.mulf %306, %314 : vector<8x32xf32>
    %323 = arith.addf %321, %322 : vector<8x32xf32>
    %324 = math.tanh %323 : vector<8x32xf32>
    %325 = arith.mulf %320, %324 : vector<8x32xf32>
    %326 = vector.extract_strided_slice %239 {offsets = [24, 0], sizes = [8, 128], strides = [1, 1]} : vector<64x128xf32> to vector<8x128xf32>
    %cst_62 = arith.constant dense<0.000000e+00> : vector<8x128xf32>
    %327 = tpu.matmul %325, %235, %cst_62 {dimension_numbers = #tpu.dot_dimension_numbers<[1], [0], [0], [1], [0, 0, 1, 1], [], []>} : vector<8x32xf32>, vector<32x128xf32>, vector<8x128xf32> -> vector<8x128xf32>
    %328 = arith.addf %326, %327 : vector<8x128xf32>
    %329 = vector.extract_strided_slice %328 {offsets = [0, 0], sizes = [8, 32], strides = [1, 1]} : vector<8x128xf32> to vector<8x32xf32>
    %330 = arith.negf %329 : vector<8x32xf32>
    %331 = math.exp %330 : vector<8x32xf32>
    %cst_63 = arith.constant 1.000000e+00 : f32
    %332 = vector.broadcast %cst_63 : f32 to vector<8x32xf32>
    %333 = arith.addf %332, %331 : vector<8x32xf32>
    %334 = arith.divf %332, %333 : vector<8x32xf32>
    %335 = vector.extract_strided_slice %328 {offsets = [0, 32], sizes = [8, 32], strides = [1, 1]} : vector<8x128xf32> to vector<8x32xf32>
    %336 = arith.negf %335 : vector<8x32xf32>
    %337 = math.exp %336 : vector<8x32xf32>
    %cst_64 = arith.constant 1.000000e+00 : f32
    %338 = vector.broadcast %cst_64 : f32 to vector<8x32xf32>
    %339 = arith.addf %338, %337 : vector<8x32xf32>
    %340 = arith.divf %338, %339 : vector<8x32xf32>
    %341 = vector.extract_strided_slice %328 {offsets = [0, 64], sizes = [8, 32], strides = [1, 1]} : vector<8x128xf32> to vector<8x32xf32>
    %342 = math.tanh %341 : vector<8x32xf32>
    %343 = vector.extract_strided_slice %328 {offsets = [0, 96], sizes = [8, 32], strides = [1, 1]} : vector<8x128xf32> to vector<8x32xf32>
    %344 = arith.negf %343 : vector<8x32xf32>
    %345 = math.exp %344 : vector<8x32xf32>
    %cst_65 = arith.constant 1.000000e+00 : f32
    %346 = vector.broadcast %cst_65 : f32 to vector<8x32xf32>
    %347 = arith.addf %346, %345 : vector<8x32xf32>
    %348 = arith.divf %346, %347 : vector<8x32xf32>
    %349 = arith.mulf %340, %323 : vector<8x32xf32>
    %350 = arith.mulf %334, %342 : vector<8x32xf32>
    %351 = arith.addf %349, %350 : vector<8x32xf32>
    %352 = math.tanh %351 : vector<8x32xf32>
    %353 = arith.mulf %348, %352 : vector<8x32xf32>
    %354 = vector.extract_strided_slice %239 {offsets = [32, 0], sizes = [8, 128], strides = [1, 1]} : vector<64x128xf32> to vector<8x128xf32>
    %cst_66 = arith.constant dense<0.000000e+00> : vector<8x128xf32>
    %355 = tpu.matmul %353, %235, %cst_66 {dimension_numbers = #tpu.dot_dimension_numbers<[1], [0], [0], [1], [0, 0, 1, 1], [], []>} : vector<8x32xf32>, vector<32x128xf32>, vector<8x128xf32> -> vector<8x128xf32>
    %356 = arith.addf %354, %355 : vector<8x128xf32>
    %357 = vector.extract_strided_slice %356 {offsets = [0, 0], sizes = [8, 32], strides = [1, 1]} : vector<8x128xf32> to vector<8x32xf32>
    %358 = arith.negf %357 : vector<8x32xf32>
    %359 = math.exp %358 : vector<8x32xf32>
    %cst_67 = arith.constant 1.000000e+00 : f32
    %360 = vector.broadcast %cst_67 : f32 to vector<8x32xf32>
    %361 = arith.addf %360, %359 : vector<8x32xf32>
    %362 = arith.divf %360, %361 : vector<8x32xf32>
    %363 = vector.extract_strided_slice %356 {offsets = [0, 32], sizes = [8, 32], strides = [1, 1]} : vector<8x128xf32> to vector<8x32xf32>
    %364 = arith.negf %363 : vector<8x32xf32>
    %365 = math.exp %364 : vector<8x32xf32>
    %cst_68 = arith.constant 1.000000e+00 : f32
    %366 = vector.broadcast %cst_68 : f32 to vector<8x32xf32>
    %367 = arith.addf %366, %365 : vector<8x32xf32>
    %368 = arith.divf %366, %367 : vector<8x32xf32>
    %369 = vector.extract_strided_slice %356 {offsets = [0, 64], sizes = [8, 32], strides = [1, 1]} : vector<8x128xf32> to vector<8x32xf32>
    %370 = math.tanh %369 : vector<8x32xf32>
    %371 = vector.extract_strided_slice %356 {offsets = [0, 96], sizes = [8, 32], strides = [1, 1]} : vector<8x128xf32> to vector<8x32xf32>
    %372 = arith.negf %371 : vector<8x32xf32>
    %373 = math.exp %372 : vector<8x32xf32>
    %cst_69 = arith.constant 1.000000e+00 : f32
    %374 = vector.broadcast %cst_69 : f32 to vector<8x32xf32>
    %375 = arith.addf %374, %373 : vector<8x32xf32>
    %376 = arith.divf %374, %375 : vector<8x32xf32>
    %377 = arith.mulf %368, %351 : vector<8x32xf32>
    %378 = arith.mulf %362, %370 : vector<8x32xf32>
    %379 = arith.addf %377, %378 : vector<8x32xf32>
    %380 = math.tanh %379 : vector<8x32xf32>
    %381 = arith.mulf %376, %380 : vector<8x32xf32>
    %382 = vector.extract_strided_slice %239 {offsets = [40, 0], sizes = [8, 128], strides = [1, 1]} : vector<64x128xf32> to vector<8x128xf32>
    %cst_70 = arith.constant dense<0.000000e+00> : vector<8x128xf32>
    %383 = tpu.matmul %381, %235, %cst_70 {dimension_numbers = #tpu.dot_dimension_numbers<[1], [0], [0], [1], [0, 0, 1, 1], [], []>} : vector<8x32xf32>, vector<32x128xf32>, vector<8x128xf32> -> vector<8x128xf32>
    %384 = arith.addf %382, %383 : vector<8x128xf32>
    %385 = vector.extract_strided_slice %384 {offsets = [0, 0], sizes = [8, 32], strides = [1, 1]} : vector<8x128xf32> to vector<8x32xf32>
    %386 = arith.negf %385 : vector<8x32xf32>
    %387 = math.exp %386 : vector<8x32xf32>
    %cst_71 = arith.constant 1.000000e+00 : f32
    %388 = vector.broadcast %cst_71 : f32 to vector<8x32xf32>
    %389 = arith.addf %388, %387 : vector<8x32xf32>
    %390 = arith.divf %388, %389 : vector<8x32xf32>
    %391 = vector.extract_strided_slice %384 {offsets = [0, 32], sizes = [8, 32], strides = [1, 1]} : vector<8x128xf32> to vector<8x32xf32>
    %392 = arith.negf %391 : vector<8x32xf32>
    %393 = math.exp %392 : vector<8x32xf32>
    %cst_72 = arith.constant 1.000000e+00 : f32
    %394 = vector.broadcast %cst_72 : f32 to vector<8x32xf32>
    %395 = arith.addf %394, %393 : vector<8x32xf32>
    %396 = arith.divf %394, %395 : vector<8x32xf32>
    %397 = vector.extract_strided_slice %384 {offsets = [0, 64], sizes = [8, 32], strides = [1, 1]} : vector<8x128xf32> to vector<8x32xf32>
    %398 = math.tanh %397 : vector<8x32xf32>
    %399 = vector.extract_strided_slice %384 {offsets = [0, 96], sizes = [8, 32], strides = [1, 1]} : vector<8x128xf32> to vector<8x32xf32>
    %400 = arith.negf %399 : vector<8x32xf32>
    %401 = math.exp %400 : vector<8x32xf32>
    %cst_73 = arith.constant 1.000000e+00 : f32
    %402 = vector.broadcast %cst_73 : f32 to vector<8x32xf32>
    %403 = arith.addf %402, %401 : vector<8x32xf32>
    %404 = arith.divf %402, %403 : vector<8x32xf32>
    %405 = arith.mulf %396, %379 : vector<8x32xf32>
    %406 = arith.mulf %390, %398 : vector<8x32xf32>
    %407 = arith.addf %405, %406 : vector<8x32xf32>
    %408 = math.tanh %407 : vector<8x32xf32>
    %409 = arith.mulf %404, %408 : vector<8x32xf32>
    %410 = vector.extract_strided_slice %239 {offsets = [48, 0], sizes = [8, 128], strides = [1, 1]} : vector<64x128xf32> to vector<8x128xf32>
    %cst_74 = arith.constant dense<0.000000e+00> : vector<8x128xf32>
    %411 = tpu.matmul %409, %235, %cst_74 {dimension_numbers = #tpu.dot_dimension_numbers<[1], [0], [0], [1], [0, 0, 1, 1], [], []>} : vector<8x32xf32>, vector<32x128xf32>, vector<8x128xf32> -> vector<8x128xf32>
    %412 = arith.addf %410, %411 : vector<8x128xf32>
    %413 = vector.extract_strided_slice %412 {offsets = [0, 0], sizes = [8, 32], strides = [1, 1]} : vector<8x128xf32> to vector<8x32xf32>
    %414 = arith.negf %413 : vector<8x32xf32>
    %415 = math.exp %414 : vector<8x32xf32>
    %cst_75 = arith.constant 1.000000e+00 : f32
    %416 = vector.broadcast %cst_75 : f32 to vector<8x32xf32>
    %417 = arith.addf %416, %415 : vector<8x32xf32>
    %418 = arith.divf %416, %417 : vector<8x32xf32>
    %419 = vector.extract_strided_slice %412 {offsets = [0, 32], sizes = [8, 32], strides = [1, 1]} : vector<8x128xf32> to vector<8x32xf32>
    %420 = arith.negf %419 : vector<8x32xf32>
    %421 = math.exp %420 : vector<8x32xf32>
    %cst_76 = arith.constant 1.000000e+00 : f32
    %422 = vector.broadcast %cst_76 : f32 to vector<8x32xf32>
    %423 = arith.addf %422, %421 : vector<8x32xf32>
    %424 = arith.divf %422, %423 : vector<8x32xf32>
    %425 = vector.extract_strided_slice %412 {offsets = [0, 64], sizes = [8, 32], strides = [1, 1]} : vector<8x128xf32> to vector<8x32xf32>
    %426 = math.tanh %425 : vector<8x32xf32>
    %427 = vector.extract_strided_slice %412 {offsets = [0, 96], sizes = [8, 32], strides = [1, 1]} : vector<8x128xf32> to vector<8x32xf32>
    %428 = arith.negf %427 : vector<8x32xf32>
    %429 = math.exp %428 : vector<8x32xf32>
    %cst_77 = arith.constant 1.000000e+00 : f32
    %430 = vector.broadcast %cst_77 : f32 to vector<8x32xf32>
    %431 = arith.addf %430, %429 : vector<8x32xf32>
    %432 = arith.divf %430, %431 : vector<8x32xf32>
    %433 = arith.mulf %424, %407 : vector<8x32xf32>
    %434 = arith.mulf %418, %426 : vector<8x32xf32>
    %435 = arith.addf %433, %434 : vector<8x32xf32>
    %436 = math.tanh %435 : vector<8x32xf32>
    %437 = arith.mulf %432, %436 : vector<8x32xf32>
    %438 = vector.extract_strided_slice %239 {offsets = [56, 0], sizes = [8, 128], strides = [1, 1]} : vector<64x128xf32> to vector<8x128xf32>
    %cst_78 = arith.constant dense<0.000000e+00> : vector<8x128xf32>
    %439 = tpu.matmul %437, %235, %cst_78 {dimension_numbers = #tpu.dot_dimension_numbers<[1], [0], [0], [1], [0, 0, 1, 1], [], []>} : vector<8x32xf32>, vector<32x128xf32>, vector<8x128xf32> -> vector<8x128xf32>
    %440 = arith.addf %438, %439 : vector<8x128xf32>
    %441 = vector.extract_strided_slice %440 {offsets = [0, 0], sizes = [8, 32], strides = [1, 1]} : vector<8x128xf32> to vector<8x32xf32>
    %442 = arith.negf %441 : vector<8x32xf32>
    %443 = math.exp %442 : vector<8x32xf32>
    %cst_79 = arith.constant 1.000000e+00 : f32
    %444 = vector.broadcast %cst_79 : f32 to vector<8x32xf32>
    %445 = arith.addf %444, %443 : vector<8x32xf32>
    %446 = arith.divf %444, %445 : vector<8x32xf32>
    %447 = vector.extract_strided_slice %440 {offsets = [0, 32], sizes = [8, 32], strides = [1, 1]} : vector<8x128xf32> to vector<8x32xf32>
    %448 = arith.negf %447 : vector<8x32xf32>
    %449 = math.exp %448 : vector<8x32xf32>
    %cst_80 = arith.constant 1.000000e+00 : f32
    %450 = vector.broadcast %cst_80 : f32 to vector<8x32xf32>
    %451 = arith.addf %450, %449 : vector<8x32xf32>
    %452 = arith.divf %450, %451 : vector<8x32xf32>
    %453 = vector.extract_strided_slice %440 {offsets = [0, 64], sizes = [8, 32], strides = [1, 1]} : vector<8x128xf32> to vector<8x32xf32>
    %454 = math.tanh %453 : vector<8x32xf32>
    %455 = vector.extract_strided_slice %440 {offsets = [0, 96], sizes = [8, 32], strides = [1, 1]} : vector<8x128xf32> to vector<8x32xf32>
    %456 = arith.negf %455 : vector<8x32xf32>
    %457 = math.exp %456 : vector<8x32xf32>
    %cst_81 = arith.constant 1.000000e+00 : f32
    %458 = vector.broadcast %cst_81 : f32 to vector<8x32xf32>
    %459 = arith.addf %458, %457 : vector<8x32xf32>
    %460 = arith.divf %458, %459 : vector<8x32xf32>
    %461 = arith.mulf %452, %435 : vector<8x32xf32>
    %462 = arith.mulf %446, %454 : vector<8x32xf32>
    %463 = arith.addf %461, %462 : vector<8x32xf32>
    %464 = math.tanh %463 : vector<8x32xf32>
    %465 = arith.mulf %460, %464 : vector<8x32xf32>
    %c0_82 = arith.constant 0 : index
    %c0_83 = arith.constant 0 : index
    %466 = vector.load %arg7[%c0_82, %c0_83] : memref<32x4xf32, #tpu.memory_space<vmem>>, vector<32x4xf32>
    %cst_84 = arith.constant dense<0.000000e+00> : vector<8x4xf32>
    %467 = tpu.matmul %465, %466, %cst_84 {dimension_numbers = #tpu.dot_dimension_numbers<[1], [0], [0], [1], [0, 0, 1, 1], [], []>} : vector<8x32xf32>, vector<32x4xf32>, vector<8x4xf32> -> vector<8x4xf32>
    %c0_85 = arith.constant 0 : index
    %c0_86 = arith.constant 0 : index
    %468 = vector.load %arg8[%c0_85, %c0_86] : memref<1x4xf32, #tpu.memory_space<vmem>>, vector<1x4xf32>
    %469 = vector.broadcast %468 : vector<1x4xf32> to vector<8x4xf32>
    %470 = arith.addf %467, %469 : vector<8x4xf32>
    %c0_87 = arith.constant 0 : index
    %c0_88 = arith.constant 0 : index
    %471 = vector.load %arg9[%c0_87, %c0_88] : memref<8x4xf32, #tpu.memory_space<vmem>>, vector<8x4xf32>
    tpu.vector_store %arg9[%c0_87, %c0_88], %470 {strides = array<i32>} : memref<8x4xf32, #tpu.memory_space<vmem>>, vector<8x4xf32>,
    return
  }
}

</mosaic_0001>

<llo_original>
// kernel: tpu_custom_call.1
$region0: #{tpu_custom_call.1}
  #allocation0 [shape = 'u32[]', space=smem, size = 0x4, offset = 0x4, fixed_abs, tag = 'smem constant byte address 0x4 - core index']
  #allocation1 [shape = 'u32[144,128]{1,0:T(1,128)}', space=vmem, size = 0x12000, scoped, tag = 'internal scratch']
  %s0 = inlined_call_operand.hbm [shape: f32[64,16], index: 0, kind: input, shape index: {}]
  %s1 = inlined_call_operand.hbm [shape: f32[16,128], index: 1, kind: input, shape index: {}]
  %s2 = inlined_call_operand.hbm [shape: f32[32,128], index: 2, kind: input, shape index: {}]
  %s3 = inlined_call_operand.hbm [shape: f32[1,128], index: 3, kind: input, shape index: {}]
  %s4 = inlined_call_operand.hbm [shape: f32[32,128], index: 4, kind: input, shape index: {}]
  %s5 = inlined_call_operand.hbm [shape: f32[32,128], index: 5, kind: input, shape index: {}]
  %s6 = inlined_call_operand.hbm [shape: f32[1,128], index: 6, kind: input, shape index: {}]
  %s7 = inlined_call_operand.hbm [shape: f32[32,4], index: 7, kind: input, shape index: {}]
  %s8 = inlined_call_operand.hbm [shape: f32[1,4], index: 8, kind: input, shape index: {}]
  %s9 = inlined_call_operand.hbm [shape: f32[8,4], index: 9, kind: output, shape index: {}]
  %s10 = sld [smem:[#allocation0]]
  $region82: #{tpu_custom_call.1} parent=0
    _
  %s12 = ssub.s32 1, %s10
  %s13 = scalar_select 0, %s12, %s10
  $region1: #{tpu_custom_call.1} parent=0
    #allocation2 [shape = 'u8[32768]{0}', space=vmem, size = 0x8000, scoped, tag = 'input window, operand 0, single buffered']
    #allocation3 [shape = 's32[1]{0}', space=sflag, size = 0x4, scoped, tag = 'scoped memory for tpu_custom_call.1']
    #allocation4 [shape = 's32[1]{0}', space=sflag, size = 0x4, scoped, tag = 'scoped memory for tpu_custom_call.1']
    #allocation5 [shape = 'u8[8192]{0}', space=vmem, size = 0x2000, scoped, tag = 'input window, operand 1, single buffered']
    #allocation6 [shape = 's32[1]{0}', space=sflag, size = 0x4, scoped, tag = 'scoped memory for tpu_custom_call.1']
    #allocation7 [shape = 'u8[16384]{0}', space=vmem, size = 0x4000, scoped, tag = 'input window, operand 2, single buffered']
    #allocation8 [shape = 'u8[512]{0}', space=vmem, size = 0x400, scoped, tag = 'input window, operand 3, single buffered']
    #allocation9 [shape = 's32[1]{0}', space=sflag, size = 0x4, scoped, tag = 'scoped memory for tpu_custom_call.1']
    #allocation10 [shape = 'u8[16384]{0}', space=vmem, size = 0x4000, scoped, tag = 'input window, operand 4, single buffered']
    #allocation11 [shape = 'u8[16384]{0}', space=vmem, size = 0x4000, scoped, tag = 'input window, operand 5, single buffered']
    #allocation12 [shape = 's32[1]{0}', space=sflag, size = 0x4, scoped, tag = 'scoped memory for tpu_custom_call.1']
    #allocation13 [shape = 'u8[512]{0}', space=vmem, size = 0x400, scoped, tag = 'input window, operand 6, single buffered']
    #allocation14 [shape = 'u8[16384]{0}', space=vmem, size = 0x4000, scoped, tag = 'input window, operand 7, single buffered']
    #allocation15 [shape = 's32[1]{0}', space=sflag, size = 0x4, scoped, tag = 'scoped memory for tpu_custom_call.1']
    #allocation16 [shape = 'u8[512]{0}', space=vmem, size = 0x400, scoped, tag = 'input window, operand 8, single buffered']
    #allocation17 [shape = 'u8[4096]{0}', space=vmem, size = 0x1000, scoped, tag = 'output window, operand 0, single buffered']
    %14 = vsyncpa [#allocation3], 0
    %15 = vsyncpa [#allocation6], 0
    %16 = vsyncpa [#allocation9], 0
    %17 = vsyncpa [#allocation12], 0
    %18 = vsyncpa [#allocation15], 0
    %19 = vsyncpa [#allocation4], 0
    // Predicated region
    $region2: #{tpu_custom_call.1} parent=1 // pred_check
      _
    $region3: #{tpu_custom_call.1} parent=1 // pred_check_branch
      %21 = sbr.rel (0) target = $region5
    $region4: #{tpu_custom_call.1} parent=1 // pred_region
      %s23 = ssub.s32 1024, 1024
      %24 = vsyncadd [#allocation3], %s23
      %s25 = sshll.u32 [#allocation2], 4
      %s26 = int_to_ptr.vmem [resolvable:$true] %s25
      %31 = dma.hbm_to_vmem [thread:$0]  %s0, 1024, %s26, [#allocation3], 128, 128, 8
    $region5: #{tpu_custom_call.1} parent=1 // pred_fallthru
      _
    // Predicated region
    $region6: #{tpu_custom_call.1} parent=1 // pred_check
      _
    $region7: #{tpu_custom_call.1} parent=1 // pred_check_branch
      %33 = sbr.rel (0) target = $region9
    $region8: #{tpu_custom_call.1} parent=1 // pred_region
      %s35 = ssub.s32 256, 256
      %36 = vsyncadd [#allocation6], %s35
      %s37 = sshll.u32 [#allocation5], 4
      %s38 = int_to_ptr.vmem [resolvable:$true] %s37
      %43 = dma.hbm_to_vmem [thread:$0]  %s1, 256, %s38, [#allocation6], 128, 128, 8
    $region9: #{tpu_custom_call.1} parent=1 // pred_fallthru
      _
    // Predicated region
    $region10: #{tpu_custom_call.1} parent=1 // pred_check
      _
    $region11: #{tpu_custom_call.1} parent=1 // pred_check_branch
      %45 = sbr.rel (0) target = $region13
    $region12: #{tpu_custom_call.1} parent=1 // pred_region
      %s47 = ssub.s32 512, 512
      %48 = vsyncadd [#allocation6], %s47
      %s49 = sshll.u32 [#allocation7], 4
      %s50 = int_to_ptr.vmem [resolvable:$true] %s49
      %55 = dma.hbm_to_vmem [thread:$0]  %s2, 512, %s50, [#allocation6], 128, 128, 8
    $region13: #{tpu_custom_call.1} parent=1 // pred_fallthru
      _
    // Predicated region
    $region14: #{tpu_custom_call.1} parent=1 // pred_check
      _
    $region15: #{tpu_custom_call.1} parent=1 // pred_check_branch
      %57 = sbr.rel (0) target = $region17
    $region16: #{tpu_custom_call.1} parent=1 // pred_region
      %s59 = ssub.s32 16, 16
      %60 = vsyncadd [#allocation9], %s59
      %s62 = sshll.u32 [#allocation8], 4
      %s63 = int_to_ptr.vmem [resolvable:$true] %s62
      %65 = dma.hbm_to_vmem [thread:$0]  %s3, 16, %s63, [#allocation9]
    $region17: #{tpu_custom_call.1} parent=1 // pred_fallthru
      _
    // Predicated region
    $region18: #{tpu_custom_call.1} parent=1 // pred_check
      _
    $region19: #{tpu_custom_call.1} parent=1 // pred_check_branch
      %67 = sbr.rel (0) target = $region21
    $region20: #{tpu_custom_call.1} parent=1 // pred_region
      %s69 = ssub.s32 512, 512
      %70 = vsyncadd [#allocation9], %s69
      %s71 = sshll.u32 [#allocation10], 4
      %s72 = int_to_ptr.vmem [resolvable:$true] %s71
      %77 = dma.hbm_to_vmem [thread:$0]  %s4, 512, %s72, [#allocation9], 128, 128, 8
    $region21: #{tpu_custom_call.1} parent=1 // pred_fallthru
      _
    // Predicated region
    $region22: #{tpu_custom_call.1} parent=1 // pred_check
      _
    $region23: #{tpu_custom_call.1} parent=1 // pred_check_branch
      %79 = sbr.rel (0) target = $region25
    $region24: #{tpu_custom_call.1} parent=1 // pred_region
      %s81 = ssub.s32 512, 512
      %82 = vsyncadd [#allocation12], %s81
      %s83 = sshll.u32 [#allocation11], 4
      %s84 = int_to_ptr.vmem [resolvable:$true] %s83
      %89 = dma.hbm_to_vmem [thread:$0]  %s5, 512, %s84, [#allocation12], 128, 128, 8
    $region25: #{tpu_custom_call.1} parent=1 // pred_fallthru
      _
    // Predicated region
    $region26: #{tpu_custom_call.1} parent=1 // pred_check
      _
    $region27: #{tpu_custom_call.1} parent=1 // pred_check_branch
      %91 = sbr.rel (0) target = $region29
    $region28: #{tpu_custom_call.1} parent=1 // pred_region
      %s93 = ssub.s32 16, 16
      %94 = vsyncadd [#allocation12], %s93
      %s96 = sshll.u32 [#allocation13], 4
      %s97 = int_to_ptr.vmem [resolvable:$true] %s96
      %99 = dma.hbm_to_vmem [thread:$0]  %s6, 16, %s97, [#allocation12]
    $region29: #{tpu_custom_call.1} parent=1 // pred_fallthru
      _
    // Predicated region
    $region30: #{tpu_custom_call.1} parent=1 // pred_check
      _
    $region31: #{tpu_custom_call.1} parent=1 // pred_check_branch
      %101 = sbr.rel (0) target = $region33
    $region32: #{tpu_custom_call.1} parent=1 // pred_region
      %s103 = ssub.s32 512, 512
      %104 = vsyncadd [#allocation15], %s103
      %s105 = sshll.u32 [#allocation14], 4
      %s106 = int_to_ptr.vmem [resolvable:$true] %s105
      %111 = dma.hbm_to_vmem [thread:$0]  %s7, 512, %s106, [#allocation15], 128, 128, 8
    $region33: #{tpu_custom_call.1} parent=1 // pred_fallthru
      _
    // Predicated region
    $region34: #{tpu_custom_call.1} parent=1 // pred_check
      _
    $region35: #{tpu_custom_call.1} parent=1 // pred_check_branch
      %113 = sbr.rel (0) target = $region37
    $region36: #{tpu_custom_call.1} parent=1 // pred_region
      %s115 = ssub.s32 16, 16
      %116 = vsyncadd [#allocation15], %s115
      %s118 = sshll.u32 [#allocation16], 4
      %s119 = int_to_ptr.vmem [resolvable:$true] %s118
      %121 = dma.hbm_to_vmem [thread:$0]  %s8, 16, %s119, [#allocation15]
    $region37: #{tpu_custom_call.1} parent=1 // pred_fallthru
      _
    // Predicated region
    $region38: #{tpu_custom_call.1} parent=1 // pred_check
      _
    $region39: #{tpu_custom_call.1} parent=1 // pred_check_branch
      %123 = sbr.rel (0) target = $region41
    $region40: #{tpu_custom_call.1} parent=1 // pred_region
      %124 = dma.done [#allocation3], 1024
    $region41: #{tpu_custom_call.1} parent=1 // pred_fallthru
      _
    // Predicated region
    $region42: #{tpu_custom_call.1} parent=1 // pred_check
      _
    $region43: #{tpu_custom_call.1} parent=1 // pred_check_branch
      %126 = sbr.rel (0) target = $region45
    $region44: #{tpu_custom_call.1} parent=1 // pred_region
      %127 = dma.done [#allocation6], 256
    $region45: #{tpu_custom_call.1} parent=1 // pred_fallthru
      _
    // Predicated region
    $region46: #{tpu_custom_call.1} parent=1 // pred_check
      _
    $region47: #{tpu_custom_call.1} parent=1 // pred_check_branch
      %129 = sbr.rel (0) target = $region49
    $region48: #{tpu_custom_call.1} parent=1 // pred_region
      %130 = dma.done [#allocation6], 512
    $region49: #{tpu_custom_call.1} parent=1 // pred_fallthru
      _
    // Predicated region
    $region50: #{tpu_custom_call.1} parent=1 // pred_check
      _
    $region51: #{tpu_custom_call.1} parent=1 // pred_check_branch
      %132 = sbr.rel (0) target = $region53
    $region52: #{tpu_custom_call.1} parent=1 // pred_region
      %133 = dma.done [#allocation9], 16
    $region53: #{tpu_custom_call.1} parent=1 // pred_fallthru
      _
    // Predicated region
    $region54: #{tpu_custom_call.1} parent=1 // pred_check
      _
    $region55: #{tpu_custom_call.1} parent=1 // pred_check_branch
      %135 = sbr.rel (0) target = $region57
    $region56: #{tpu_custom_call.1} parent=1 // pred_region
      %136 = dma.done [#allocation9], 512
    $region57: #{tpu_custom_call.1} parent=1 // pred_fallthru
      _
    // Predicated region
    $region58: #{tpu_custom_call.1} parent=1 // pred_check
      _
    $region59: #{tpu_custom_call.1} parent=1 // pred_check_branch
      %138 = sbr.rel (0) target = $region61
    $region60: #{tpu_custom_call.1} parent=1 // pred_region
      %139 = dma.done [#allocation12], 512
    $region61: #{tpu_custom_call.1} parent=1 // pred_fallthru
      _
    // Predicated region
    $region62: #{tpu_custom_call.1} parent=1 // pred_check
      _
    $region63: #{tpu_custom_call.1} parent=1 // pred_check_branch
      %141 = sbr.rel (0) target = $region65
    $region64: #{tpu_custom_call.1} parent=1 // pred_region
      %142 = dma.done [#allocation12], 16
    $region65: #{tpu_custom_call.1} parent=1 // pred_fallthru
      _
    // Predicated region
    $region66: #{tpu_custom_call.1} parent=1 // pred_check
      _
    $region67: #{tpu_custom_call.1} parent=1 // pred_check_branch
      %144 = sbr.rel (0) target = $region69
    $region68: #{tpu_custom_call.1} parent=1 // pred_region
      %145 = dma.done [#allocation15], 512
    $region69: #{tpu_custom_call.1} parent=1 // pred_fallthru
      _
    // Predicated region
    $region70: #{tpu_custom_call.1} parent=1 // pred_check
      _
    $region71: #{tpu_custom_call.1} parent=1 // pred_check_branch
      %147 = sbr.rel (0) target = $region73
    $region72: #{tpu_custom_call.1} parent=1 // pred_region
      %148 = dma.done [#allocation15], 16
    $region73: #{tpu_custom_call.1} parent=1 // pred_fallthru
      _
    %v149 = vld [vmem:[#allocation2] sm:$0xff]
    %v150 = vld [vmem:[#allocation2 + $0x8] sm:$0xff]
    %v151 = vld [vmem:[#allocation2 + $0x10] sm:$0xff]
    %v152 = vld [vmem:[#allocation2 + $0x18] sm:$0xff]
    %v153 = vld [vmem:[#allocation2 + $0x20] sm:$0xff]
    %v154 = vld [vmem:[#allocation2 + $0x28] sm:$0xff]
    %v155 = vld [vmem:[#allocation2 + $0x30] sm:$0xff]
    %v156 = vld [vmem:[#allocation2 + $0x38] sm:$0xff]
    %v157 = vld [vmem:[#allocation5] sm:$0xff]
    %v158 = vld [vmem:[#allocation5 + $0x8] sm:$0xff]
    %v159 = vld [vmem:[#allocation7] sm:$0xff]
    %v160 = vld [vmem:[#allocation7 + $0x8] sm:$0xff]
    %v161 = vld [vmem:[#allocation7 + $0x10] sm:$0xff]
    %v162 = vld [vmem:[#allocation7 + $0x18] sm:$0xff]
    %v163 = vld [vmem:[#allocation8] sm:$0x1]
    %v165 = vlaneseq
    %v166 = vshrl.u32 %v165, 7
    %v167 = vsub.s32 0, %v166
    %v168 = vrot.slane %v163, %v167
    %vm170 = vcmask 130048
    %v172 = vsel %vm170, %v149, 0
    %v175 = vsel %vm170, %v150, 0
    %v178 = vsel %vm170, %v151, 0
    %v181 = vsel %vm170, %v152, 0
    %v184 = vsel %vm170, %v153, 0
    %v187 = vsel %vm170, %v154, 0
    %v190 = vsel %vm170, %v155, 0
    %v193 = vsel %vm170, %v156, 0
    %195 = vmatprep.subr.mxu0 0.0
    %196 = vmatpush1.msra.mxu0 %v157
    %197 = vmatprep.subr.mxu0 0.0
    %198 = vmatpush1.msra.mxu0 %v158
    %199 = vmatprep.subr.mxu0 0.0
    %200 = vmatpush1.msra.mxu0 0.0
    %201 = vmatprep.subr.mxu0 0.0
    %202 = vmatpush1.msra.mxu0 0.0
    %203 = vmatprep.subr.mxu0 0.0
    %204 = vmatpush1.msra.mxu0 0.0
    %205 = vmatprep.subr.mxu0 0.0
    %206 = vmatpush1.msra.mxu0 0.0
    %207 = vmatprep.subr.mxu0 0.0
    %208 = vmatpush1.msra.mxu0 0.0
    %209 = vmatprep.subr.mxu0 0.0
    %210 = vmatpush1.msra.mxu0 0.0
    %211 = vmatprep.subr.mxu0 0.0
    %212 = vmatpush1.msra.mxu0 0.0
    %213 = vmatprep.subr.mxu0 0.0
    %214 = vmatpush1.msra.mxu0 0.0
    %215 = vmatprep.subr.mxu0 0.0
    %216 = vmatpush1.msra.mxu0 0.0
    %217 = vmatprep.subr.mxu0 0.0
    %218 = vmatpush1.msra.mxu0 0.0
    %219 = vmatprep.subr.mxu0 0.0
    %220 = vmatpush1.msra.mxu0 0.0
    %221 = vmatprep.subr.mxu0 0.0
    %222 = vmatpush1.msra.mxu0 0.0
    %223 = vmatprep.subr.mxu0 0.0
    %224 = vmatpush1.msra.mxu0 0.0
    %225 = vmatprep.subr.mxu0 0.0
    %226 = vmatpush1.msra.mxu0 0.0
    %227 = vmatprep.subr.mxu0 0.0
    %228 = vmatpush1.msra.mxu0 0.0
    %229 = vmatprep.subr.mxu0 0.0
    %230 = vmatpush1.msra.mxu0 0.0
    %231 = vmatprep.subr.mxu0 0.0
    %232 = vmatpush1.msra.mxu0 0.0
    %233 = vmatprep.subr.mxu0 0.0
    %234 = vmatpush1.msra.mxu0 0.0
    %235 = vmatprep.subr.mxu0 0.0
    %236 = vmatpush1.msra.mxu0 0.0
    %237 = vmatprep.subr.mxu0 0.0
    %238 = vmatpush1.msra.mxu0 0.0
    %239 = vmatprep.subr.mxu0 0.0
    %240 = vmatpush1.msra.mxu0 0.0
    %241 = vmatprep.subr.mxu0 0.0
    %242 = vmatpush1.msra.mxu0 0.0
    %243 = vmatprep.subr.mxu0 0.0
    %244 = vmatpush1.msra.mxu0 0.0
    %245 = vmatprep.subr.mxu0 0.0
    %246 = vmatpush1.msra.mxu0 0.0
    %247 = vmatprep.subr.mxu0 0.0
    %248 = vmatpush1.msra.mxu0 0.0
    %249 = vmatprep.subr.mxu0 0.0
    %250 = vmatpush1.msra.mxu0 0.0
    %251 = vmatprep.subr.mxu0 0.0
    %252 = vmatpush1.msra.mxu0 0.0
    %253 = vmatprep.subr.mxu0 0.0
    %254 = vmatpush1.msra.mxu0 0.0
    %255 = vmatprep.subr.mxu0 0.0
    %256 = vmatpush1.msra.mxu0 0.0
    %257 = vmatprep.subr.mxu0 0.0
    %258 = vmatpush1.msra.mxu0 0.0
    %259 = vmatprep.mubr.f32.mxu0 0.0
    %260 = vmatmul.mubr.f32.gmra.mrb[0].mxu0 %v172
    %v261 = vpop.f32.mrb[0].mxu0
    %v262 = vadd.f32 %v168, %v261
    %v263 = vpop.f32.mrb[0].mxu0
    %264 = vmatprep.mubr.f32.mxu0 0.0
    %265 = vmatmul.mubr.f32.gmra.mrb[0].mxu0 %v175
    %v266 = vpop.f32.mrb[0].mxu0
    %v267 = vadd.f32 %v168, %v266
    %v268 = vpop.f32.mrb[0].mxu0
    %269 = vmatprep.mubr.f32.mxu0 0.0
    %270 = vmatmul.mubr.f32.gmra.mrb[0].mxu0 %v178
    %v271 = vpop.f32.mrb[0].mxu0
    %v272 = vadd.f32 %v168, %v271
    %v273 = vpop.f32.mrb[0].mxu0
    %274 = vmatprep.mubr.f32.mxu0 0.0
    %275 = vmatmul.mubr.f32.gmra.mrb[0].mxu0 %v181
    %v276 = vpop.f32.mrb[0].mxu0
    %v277 = vadd.f32 %v168, %v276
    %v278 = vpop.f32.mrb[0].mxu0
    %279 = vmatprep.mubr.f32.mxu0 0.0
    %280 = vmatmul.mubr.f32.gmra.mrb[0].mxu0 %v184
    %v281 = vpop.f32.mrb[0].mxu0
    %v282 = vadd.f32 %v168, %v281
    %v283 = vpop.f32.mrb[0].mxu0
    %284 = vmatprep.mubr.f32.mxu0 0.0
    %285 = vmatmul.mubr.f32.gmra.mrb[0].mxu0 %v187
    %v286 = vpop.f32.mrb[0].mxu0
    %v287 = vadd.f32 %v168, %v286
    %v288 = vpop.f32.mrb[0].mxu0
    %289 = vmatprep.mubr.f32.mxu0 0.0
    %290 = vmatmul.mubr.f32.gmra.mrb[0].mxu0 %v190
    %v291 = vpop.f32.mrb[0].mxu0
    %v292 = vadd.f32 %v168, %v291
    %v293 = vpop.f32.mrb[0].mxu0
    %294 = vmatprep.mubr.f32.mxu0 0.0
    %295 = vmatmul.mubr.f32.gmra.mrb[0].mxu0 %v193
    %v296 = vpop.f32.mrb[0].mxu0
    %v297 = vadd.f32 %v168, %v296
    %v298 = vpop.f32.mrb[0].mxu0
    %299 = vdwg.mxu0
    %vm300 = vcmask 261120
    %v302 = vsel %vm300, 0.0, 0
    %304 = vmatprep.subr.mxu0 0.0
    %305 = vmatpush1.msra.mxu0 %v159
    %306 = vmatprep.subr.mxu0 0.0
    %307 = vmatpush1.msra.mxu0 %v160
    %308 = vmatprep.subr.mxu0 0.0
    %309 = vmatpush1.msra.mxu0 %v161
    %310 = vmatprep.subr.mxu0 0.0
    %311 = vmatpush1.msra.mxu0 %v162
    %312 = vmatprep.subr.mxu0 0.0
    %313 = vmatpush1.msra.mxu0 0.0
    %314 = vmatprep.subr.mxu0 0.0
    %315 = vmatpush1.msra.mxu0 0.0
    %316 = vmatprep.subr.mxu0 0.0
    %317 = vmatpush1.msra.mxu0 0.0
    %318 = vmatprep.subr.mxu0 0.0
    %319 = vmatpush1.msra.mxu0 0.0
    %320 = vmatprep.subr.mxu0 0.0
    %321 = vmatpush1.msra.mxu0 0.0
    %322 = vmatprep.subr.mxu0 0.0
    %323 = vmatpush1.msra.mxu0 0.0
    %324 = vmatprep.subr.mxu0 0.0
    %325 = vmatpush1.msra.mxu0 0.0
    %326 = vmatprep.subr.mxu0 0.0
    %327 = vmatpush1.msra.mxu0 0.0
    %328 = vmatprep.subr.mxu0 0.0
    %329 = vmatpush1.msra.mxu0 0.0
    %330 = vmatprep.subr.mxu0 0.0
    %331 = vmatpush1.msra.mxu0 0.0
    %332 = vmatprep.subr.mxu0 0.0
    %333 = vmatpush1.msra.mxu0 0.0
    %334 = vmatprep.subr.mxu0 0.0
    %335 = vmatpush1.msra.mxu0 0.0
    %336 = vmatprep.subr.mxu0 0.0
    %337 = vmatpush1.msra.mxu0 0.0
    %338 = vmatprep.subr.mxu0 0.0
    %339 = vmatpush1.msra.mxu0 0.0
    %340 = vmatprep.subr.mxu0 0.0
    %341 = vmatpush1.msra.mxu0 0.0
    %342 = vmatprep.subr.mxu0 0.0
    %343 = vmatpush1.msra.mxu0 0.0
    %344 = vmatprep.subr.mxu0 0.0
    %345 = vmatpush1.msra.mxu0 0.0
    %346 = vmatprep.subr.mxu0 0.0
    %347 = vmatpush1.msra.mxu0 0.0
    %348 = vmatprep.subr.mxu0 0.0
    %349 = vmatpush1.msra.mxu0 0.0
    %350 = vmatprep.subr.mxu0 0.0
    %351 = vmatpush1.msra.mxu0 0.0
    %352 = vmatprep.subr.mxu0 0.0
    %353 = vmatpush1.msra.mxu0 0.0
    %354 = vmatprep.subr.mxu0 0.0
    %355 = vmatpush1.msra.mxu0 0.0
    %356 = vmatprep.subr.mxu0 0.0
    %357 = vmatpush1.msra.mxu0 0.0
    %358 = vmatprep.subr.mxu0 0.0
    %359 = vmatpush1.msra.mxu0 0.0
    %360 = vmatprep.subr.mxu0 0.0
    %361 = vmatpush1.msra.mxu0 0.0
    %362 = vmatprep.subr.mxu0 0.0
    %363 = vmatpush1.msra.mxu0 0.0
    %364 = vmatprep.subr.mxu0 0.0
    %365 = vmatpush1.msra.mxu0 0.0
    %366 = vmatprep.subr.mxu0 0.0
    %367 = vmatpush1.msra.mxu0 0.0
    %368 = vmatprep.mubr.f32.mxu0 0.0
    %369 = vmatmul.mubr.f32.gmra.mrb[0].mxu0 %v302
    %v370 = vpop.f32.mrb[0].mxu0
    %v371 = vadd.f32 0.0, %v370
    %v372 = vpop.f32.mrb[0].mxu0
    %373 = vdwg.mxu0
    %v374 = vadd.f32 %v262, %v371
    %v375 = vxor.u32 %v374, 2147483648
    %v376 = vmul.f32 %v375, 1.442695
    %v377 = vpow.pop %v376
    %v378 = vadd.f32 %v377, 1.0
    %v379 = vrcp.pop %v378
    %v380 = vmul.f32 1.0, %v379
    %v381 = vtanh.pop %v374
    %v382 = vmul.f32 %v380, 0.0
    %384 = vrot.lane.b32.xlu0 %v381, 64
    %v385 = vpop.permute.xlu0 %384
    %v387 = vmul.f32 %v380, %v385
    %389 = vrot.lane.b32.xlu0 %v387, 32
    %v390 = vpop.permute.xlu0 %389
    %v392 = vadd.f32 %v382, %v390
    %v393 = vtanh.pop %v392
    %395 = vrot.lane.b32.xlu0 %v393, 64
    %v396 = vpop.permute.xlu0 %395
    %v398 = vmul.f32 %v380, %v396
    %400 = vrot.lane.b32.xlu0 %v398, 32
    %v401 = vpop.permute.xlu0 %400
    %v402 = vsel %vm300, %v401, 0
    %404 = vmatprep.subr.mxu0 0.0
    %405 = vmatpush1.msra.mxu0 %v159
    %406 = vmatprep.subr.mxu0 0.0
    %407 = vmatpush1.msra.mxu0 %v160
    %408 = vmatprep.subr.mxu0 0.0
    %409 = vmatpush1.msra.mxu0 %v161
    %410 = vmatprep.subr.mxu0 0.0
    %411 = vmatpush1.msra.mxu0 %v162
    %412 = vmatprep.subr.mxu0 0.0
    %413 = vmatpush1.msra.mxu0 0.0
    %414 = vmatprep.subr.mxu0 0.0
    %415 = vmatpush1.msra.mxu0 0.0
    %416 = vmatprep.subr.mxu0 0.0
    %417 = vmatpush1.msra.mxu0 0.0
    %418 = vmatprep.subr.mxu0 0.0
    %419 = vmatpush1.msra.mxu0 0.0
    %420 = vmatprep.subr.mxu0 0.0
    %421 = vmatpush1.msra.mxu0 0.0
    %422 = vmatprep.subr.mxu0 0.0
    %423 = vmatpush1.msra.mxu0 0.0
    %424 = vmatprep.subr.mxu0 0.0
    %425 = vmatpush1.msra.mxu0 0.0
    %426 = vmatprep.subr.mxu0 0.0
    %427 = vmatpush1.msra.mxu0 0.0
    %428 = vmatprep.subr.mxu0 0.0
    %429 = vmatpush1.msra.mxu0 0.0
    %430 = vmatprep.subr.mxu0 0.0
    %431 = vmatpush1.msra.mxu0 0.0
    %432 = vmatprep.subr.mxu0 0.0
    %433 = vmatpush1.msra.mxu0 0.0
    %434 = vmatprep.subr.mxu0 0.0
    %435 = vmatpush1.msra.mxu0 0.0
    %436 = vmatprep.subr.mxu0 0.0
    %437 = vmatpush1.msra.mxu0 0.0
    %438 = vmatprep.subr.mxu0 0.0
    %439 = vmatpush1.msra.mxu0 0.0
    %440 = vmatprep.subr.mxu0 0.0
    %441 = vmatpush1.msra.mxu0 0.0
    %442 = vmatprep.subr.mxu0 0.0
    %443 = vmatpush1.msra.mxu0 0.0
    %444 = vmatprep.subr.mxu0 0.0
    %445 = vmatpush1.msra.mxu0 0.0
    %446 = vmatprep.subr.mxu0 0.0
    %447 = vmatpush1.msra.mxu0 0.0
    %448 = vmatprep.subr.mxu0 0.0
    %449 = vmatpush1.msra.mxu0 0.0
    %450 = vmatprep.subr.mxu0 0.0
    %451 = vmatpush1.msra.mxu0 0.0
    %452 = vmatprep.subr.mxu0 0.0
    %453 = vmatpush1.msra.mxu0 0.0
    %454 = vmatprep.subr.mxu0 0.0
    %455 = vmatpush1.msra.mxu0 0.0
    %456 = vmatprep.subr.mxu0 0.0
    %457 = vmatpush1.msra.mxu0 0.0
    %458 = vmatprep.subr.mxu0 0.0
    %459 = vmatpush1.msra.mxu0 0.0
    %460 = vmatprep.subr.mxu0 0.0
    %461 = vmatpush1.msra.mxu0 0.0
    %462 = vmatprep.subr.mxu0 0.0
    %463 = vmatpush1.msra.mxu0 0.0
    %464 = vmatprep.subr.mxu0 0.0
    %465 = vmatpush1.msra.mxu0 0.0
    %466 = vmatprep.subr.mxu0 0.0
    %467 = vmatpush1.msra.mxu0 0.0
    %468 = vmatprep.mubr.f32.mxu0 0.0
    %469 = vmatmul.mubr.f32.gmra.mrb[0].mxu0 %v402
    %v470 = vpop.f32.mrb[0].mxu0
    %v471 = vadd.f32 0.0, %v470
    %v472 = vpop.f32.mrb[0].mxu0
    %473 = vdwg.mxu0
    %v474 = vadd.f32 %v267, %v471
    %v475 = vxor.u32 %v474, 2147483648
    %v476 = vmul.f32 %v475, 1.442695
    %v477 = vpow.pop %v476
    %v478 = vadd.f32 %v477, 1.0
    %v479 = vrcp.pop %v478
    %v480 = vmul.f32 1.0, %v479
    %v481 = vtanh.pop %v474
    %v482 = vmul.f32 %v480, %v392
    %484 = vrot.lane.b32.xlu0 %v481, 64
    %v485 = vpop.permute.xlu0 %484
    %v487 = vmul.f32 %v480, %v485
    %489 = vrot.lane.b32.xlu0 %v487, 32
    %v490 = vpop.permute.xlu0 %489
    %v492 = vadd.f32 %v482, %v490
    %v493 = vtanh.pop %v492
    %495 = vrot.lane.b32.xlu0 %v493, 64
    %v496 = vpop.permute.xlu0 %495
    %v498 = vmul.f32 %v480, %v496
    %500 = vrot.lane.b32.xlu0 %v498, 32
    %v501 = vpop.permute.xlu0 %500
    %v502 = vsel %vm300, %v501, 0
    %504 = vmatprep.subr.mxu0 0.0
    %505 = vmatpush1.msra.mxu0 %v159
    %506 = vmatprep.subr.mxu0 0.0
    %507 = vmatpush1.msra.mxu0 %v160
    %508 = vmatprep.subr.mxu0 0.0
    %509 = vmatpush1.msra.mxu0 %v161
    %510 = vmatprep.subr.mxu0 0.0
    %511 = vmatpush1.msra.mxu0 %v162
    %512 = vmatprep.subr.mxu0 0.0
    %513 = vmatpush1.msra.mxu0 0.0
    %514 = vmatprep.subr.mxu0 0.0
    %515 = vmatpush1.msra.mxu0 0.0
    %516 = vmatprep.subr.mxu0 0.0
    %517 = vmatpush1.msra.mxu0 0.0
    %518 = vmatprep.subr.mxu0 0.0
    %519 = vmatpush1.msra.mxu0 0.0
    %520 = vmatprep.subr.mxu0 0.0
    %521 = vmatpush1.msra.mxu0 0.0
    %522 = vmatprep.subr.mxu0 0.0
    %523 = vmatpush1.msra.mxu0 0.0
    %524 = vmatprep.subr.mxu0 0.0
    %525 = vmatpush1.msra.mxu0 0.0
    %526 = vmatprep.subr.mxu0 0.0
    %527 = vmatpush1.msra.mxu0 0.0
    %528 = vmatprep.subr.mxu0 0.0
    %529 = vmatpush1.msra.mxu0 0.0
    %530 = vmatprep.subr.mxu0 0.0
    %531 = vmatpush1.msra.mxu0 0.0
    %532 = vmatprep.subr.mxu0 0.0
    %533 = vmatpush1.msra.mxu0 0.0
    %534 = vmatprep.subr.mxu0 0.0
    %535 = vmatpush1.msra.mxu0 0.0
    %536 = vmatprep.subr.mxu0 0.0
    %537 = vmatpush1.msra.mxu0 0.0
    %538 = vmatprep.subr.mxu0 0.0
    %539 = vmatpush1.msra.mxu0 0.0
    %540 = vmatprep.subr.mxu0 0.0
    %541 = vmatpush1.msra.mxu0 0.0
    %542 = vmatprep.subr.mxu0 0.0
    %543 = vmatpush1.msra.mxu0 0.0
    %544 = vmatprep.subr.mxu0 0.0
    %545 = vmatpush1.msra.mxu0 0.0
    %546 = vmatprep.subr.mxu0 0.0
    %547 = vmatpush1.msra.mxu0 0.0
    %548 = vmatprep.subr.mxu0 0.0
    %549 = vmatpush1.msra.mxu0 0.0
    %550 = vmatprep.subr.mxu0 0.0
    %551 = vmatpush1.msra.mxu0 0.0
    %552 = vmatprep.subr.mxu0 0.0
    %553 = vmatpush1.msra.mxu0 0.0
    %554 = vmatprep.subr.mxu0 0.0
    %555 = vmatpush1.msra.mxu0 0.0
    %556 = vmatprep.subr.mxu0 0.0
    %557 = vmatpush1.msra.mxu0 0.0
    %558 = vmatprep.subr.mxu0 0.0
    %559 = vmatpush1.msra.mxu0 0.0
    %560 = vmatprep.subr.mxu0 0.0
    %561 = vmatpush1.msra.mxu0 0.0
    %562 = vmatprep.subr.mxu0 0.0
    %563 = vmatpush1.msra.mxu0 0.0
    %564 = vmatprep.subr.mxu0 0.0
    %565 = vmatpush1.msra.mxu0 0.0
    %566 = vmatprep.subr.mxu0 0.0
    %567 = vmatpush1.msra.mxu0 0.0
    %568 = vmatprep.mubr.f32.mxu0 0.0
    %569 = vmatmul.mubr.f32.gmra.mrb[0].mxu0 %v502
    %v570 = vpop.f32.mrb[0].mxu0
    %v571 = vadd.f32 0.0, %v570
    %v572 = vpop.f32.mrb[0].mxu0
    %573 = vdwg.mxu0
    %v574 = vadd.f32 %v272, %v571
    %v575 = vxor.u32 %v574, 2147483648
    %v576 = vmul.f32 %v575, 1.442695
    %v577 = vpow.pop %v576
    %v578 = vadd.f32 %v577, 1.0
    %v579 = vrcp.pop %v578
    %v580 = vmul.f32 1.0, %v579
    %v581 = vtanh.pop %v574
    %v582 = vmul.f32 %v580, %v492
    %584 = vrot.lane.b32.xlu0 %v581, 64
    %v585 = vpop.permute.xlu0 %584
    %v587 = vmul.f32 %v580, %v585
    %589 = vrot.lane.b32.xlu0 %v587, 32
    %v590 = vpop.permute.xlu0 %589
    %v592 = vadd.f32 %v582, %v590
    %v593 = vtanh.pop %v592
    %595 = vrot.lane.b32.xlu0 %v593, 64
    %v596 = vpop.permute.xlu0 %595
    %v598 = vmul.f32 %v580, %v596
    %600 = vrot.lane.b32.xlu0 %v598, 32
    %v601 = vpop.permute.xlu0 %600
    %v602 = vsel %vm300, %v601, 0
    %604 = vmatprep.subr.mxu0 0.0
    %605 = vmatpush1.msra.mxu0 %v159
    %606 = vmatprep.subr.mxu0 0.0
    %607 = vmatpush1.msra.mxu0 %v160
    %608 = vmatprep.subr.mxu0 0.0
    %609 = vmatpush1.msra.mxu0 %v161
    %610 = vmatprep.subr.mxu0 0.0
    %611 = vmatpush1.msra.mxu0 %v162
    %612 = vmatprep.subr.mxu0 0.0
    %613 = vmatpush1.msra.mxu0 0.0
    %614 = vmatprep.subr.mxu0 0.0
    %615 = vmatpush1.msra.mxu0 0.0
    %616 = vmatprep.subr.mxu0 0.0
    %617 = vmatpush1.msra.mxu0 0.0
    %618 = vmatprep.subr.mxu0 0.0
    %619 = vmatpush1.msra.mxu0 0.0
    %620 = vmatprep.subr.mxu0 0.0
    %621 = vmatpush1.msra.mxu0 0.0
    %622 = vmatprep.subr.mxu0 0.0
    %623 = vmatpush1.msra.mxu0 0.0
    %624 = vmatprep.subr.mxu0 0.0
    %625 = vmatpush1.msra.mxu0 0.0
    %626 = vmatprep.subr.mxu0 0.0
    %627 = vmatpush1.msra.mxu0 0.0
    %628 = vmatprep.subr.mxu0 0.0
    %629 = vmatpush1.msra.mxu0 0.0
    %630 = vmatprep.subr.mxu0 0.0
    %631 = vmatpush1.msra.mxu0 0.0
    %632 = vmatprep.subr.mxu0 0.0
    %633 = vmatpush1.msra.mxu0 0.0
    %634 = vmatprep.subr.mxu0 0.0
    %635 = vmatpush1.msra.mxu0 0.0
    %636 = vmatprep.subr.mxu0 0.0
    %637 = vmatpush1.msra.mxu0 0.0
    %638 = vmatprep.subr.mxu0 0.0
    %639 = vmatpush1.msra.mxu0 0.0
    %640 = vmatprep.subr.mxu0 0.0
    %641 = vmatpush1.msra.mxu0 0.0
    %642 = vmatprep.subr.mxu0 0.0
    %643 = vmatpush1.msra.mxu0 0.0
    %644 = vmatprep.subr.mxu0 0.0
    %645 = vmatpush1.msra.mxu0 0.0
    %646 = vmatprep.subr.mxu0 0.0
    %647 = vmatpush1.msra.mxu0 0.0
    %648 = vmatprep.subr.mxu0 0.0
    %649 = vmatpush1.msra.mxu0 0.0
    %650 = vmatprep.subr.mxu0 0.0
    %651 = vmatpush1.msra.mxu0 0.0
    %652 = vmatprep.subr.mxu0 0.0
    %653 = vmatpush1.msra.mxu0 0.0
    %654 = vmatprep.subr.mxu0 0.0
    %655 = vmatpush1.msra.mxu0 0.0
    %656 = vmatprep.subr.mxu0 0.0
    %657 = vmatpush1.msra.mxu0 0.0
    %658 = vmatprep.subr.mxu0 0.0
    %659 = vmatpush1.msra.mxu0 0.0
    %660 = vmatprep.subr.mxu0 0.0
    %661 = vmatpush1.msra.mxu0 0.0
    %662 = vmatprep.subr.mxu0 0.0
    %663 = vmatpush1.msra.mxu0 0.0
    %664 = vmatprep.subr.mxu0 0.0
    %665 = vmatpush1.msra.mxu0 0.0
    %666 = vmatprep.subr.mxu0 0.0
    %667 = vmatpush1.msra.mxu0 0.0
    %668 = vmatprep.mubr.f32.mxu0 0.0
    %669 = vmatmul.mubr.f32.gmra.mrb[0].mxu0 %v602
    %v670 = vpop.f32.mrb[0].mxu0
    %v671 = vadd.f32 0.0, %v670
    %v672 = vpop.f32.mrb[0].mxu0
    %673 = vdwg.mxu0
    %v674 = vadd.f32 %v277, %v671
    %v675 = vxor.u32 %v674, 2147483648
    %v676 = vmul.f32 %v675, 1.442695
    %v677 = vpow.pop %v676
    %v678 = vadd.f32 %v677, 1.0
    %v679 = vrcp.pop %v678
    %v680 = vmul.f32 1.0, %v679
    %v681 = vtanh.pop %v674
    %v682 = vmul.f32 %v680, %v592
    %684 = vrot.lane.b32.xlu0 %v681, 64
    %v685 = vpop.permute.xlu0 %684
    %v687 = vmul.f32 %v680, %v685
    %689 = vrot.lane.b32.xlu0 %v687, 32
    %v690 = vpop.permute.xlu0 %689
    %v692 = vadd.f32 %v682, %v690
    %v693 = vtanh.pop %v692
    %695 = vrot.lane.b32.xlu0 %v693, 64
    %v696 = vpop.permute.xlu0 %695
    %v698 = vmul.f32 %v680, %v696
    %700 = vrot.lane.b32.xlu0 %v698, 32
    %v701 = vpop.permute.xlu0 %700
    %v702 = vsel %vm300, %v701, 0
    %704 = vmatprep.subr.mxu0 0.0
    %705 = vmatpush1.msra.mxu0 %v159
    %706 = vmatprep.subr.mxu0 0.0
    %707 = vmatpush1.msra.mxu0 %v160
    %708 = vmatprep.subr.mxu0 0.0
    %709 = vmatpush1.msra.mxu0 %v161
    %710 = vmatprep.subr.mxu0 0.0
    %711 = vmatpush1.msra.mxu0 %v162
    %712 = vmatprep.subr.mxu0 0.0
    %713 = vmatpush1.msra.mxu0 0.0
    %714 = vmatprep.subr.mxu0 0.0
    %715 = vmatpush1.msra.mxu0 0.0
    %716 = vmatprep.subr.mxu0 0.0
    %717 = vmatpush1.msra.mxu0 0.0
    %718 = vmatprep.subr.mxu0 0.0
    %719 = vmatpush1.msra.mxu0 0.0
    %720 = vmatprep.subr.mxu0 0.0
    %721 = vmatpush1.msra.mxu0 0.0
    %722 = vmatprep.subr.mxu0 0.0
    %723 = vmatpush1.msra.mxu0 0.0
    %724 = vmatprep.subr.mxu0 0.0
    %725 = vmatpush1.msra.mxu0 0.0
    %726 = vmatprep.subr.mxu0 0.0
    %727 = vmatpush1.msra.mxu0 0.0
    %728 = vmatprep.subr.mxu0 0.0
    %729 = vmatpush1.msra.mxu0 0.0
    %730 = vmatprep.subr.mxu0 0.0
    %731 = vmatpush1.msra.mxu0 0.0
    %732 = vmatprep.subr.mxu0 0.0
    %733 = vmatpush1.msra.mxu0 0.0
    %734 = vmatprep.subr.mxu0 0.0
    %735 = vmatpush1.msra.mxu0 0.0
    %736 = vmatprep.subr.mxu0 0.0
    %737 = vmatpush1.msra.mxu0 0.0
    %738 = vmatprep.subr.mxu0 0.0
    %739 = vmatpush1.msra.mxu0 0.0
    %740 = vmatprep.subr.mxu0 0.0
    %741 = vmatpush1.msra.mxu0 0.0
    %742 = vmatprep.subr.mxu0 0.0
    %743 = vmatpush1.msra.mxu0 0.0
    %744 = vmatprep.subr.mxu0 0.0
    %745 = vmatpush1.msra.mxu0 0.0
    %746 = vmatprep.subr.mxu0 0.0
    %747 = vmatpush1.msra.mxu0 0.0
    %748 = vmatprep.subr.mxu0 0.0
    %749 = vmatpush1.msra.mxu0 0.0
    %750 = vmatprep.subr.mxu0 0.0
    %751 = vmatpush1.msra.mxu0 0.0
    %752 = vmatprep.subr.mxu0 0.0
    %753 = vmatpush1.msra.mxu0 0.0
    %754 = vmatprep.subr.mxu0 0.0
    %755 = vmatpush1.msra.mxu0 0.0
    %756 = vmatprep.subr.mxu0 0.0
    %757 = vmatpush1.msra.mxu0 0.0
    %758 = vmatprep.subr.mxu0 0.0
    %759 = vmatpush1.msra.mxu0 0.0
    %760 = vmatprep.subr.mxu0 0.0
    %761 = vmatpush1.msra.mxu0 0.0
    %762 = vmatprep.subr.mxu0 0.0
    %763 = vmatpush1.msra.mxu0 0.0
    %764 = vmatprep.subr.mxu0 0.0
    %765 = vmatpush1.msra.mxu0 0.0
    %766 = vmatprep.subr.mxu0 0.0
    %767 = vmatpush1.msra.mxu0 0.0
    %768 = vmatprep.mubr.f32.mxu0 0.0
    %769 = vmatmul.mubr.f32.gmra.mrb[0].mxu0 %v702
    %v770 = vpop.f32.mrb[0].mxu0
    %v771 = vadd.f32 0.0, %v770
    %v772 = vpop.f32.mrb[0].mxu0
    %773 = vdwg.mxu0
    %v774 = vadd.f32 %v282, %v771
    %v775 = vxor.u32 %v774, 2147483648
    %v776 = vmul.f32 %v775, 1.442695
    %v777 = vpow.pop %v776
    %v778 = vadd.f32 %v777, 1.0
    %v779 = vrcp.pop %v778
    %v780 = vmul.f32 1.0, %v779
    %v781 = vtanh.pop %v774
    %v782 = vmul.f32 %v780, %v692
    %784 = vrot.lane.b32.xlu0 %v781, 64
    %v785 = vpop.permute.xlu0 %784
    %v787 = vmul.f32 %v780, %v785
    %789 = vrot.lane.b32.xlu0 %v787, 32
    %v790 = vpop.permute.xlu0 %789
    %v792 = vadd.f32 %v782, %v790
    %v793 = vtanh.pop %v792
    %795 = vrot.lane.b32.xlu0 %v793, 64
    %v796 = vpop.permute.xlu0 %795
    %v798 = vmul.f32 %v780, %v796
    %800 = vrot.lane.b32.xlu0 %v798, 32
    %v801 = vpop.permute.xlu0 %800
    %v802 = vsel %vm300, %v801, 0
    %804 = vmatprep.subr.mxu0 0.0
    %805 = vmatpush1.msra.mxu0 %v159
    %806 = vmatprep.subr.mxu0 0.0
    %807 = vmatpush1.msra.mxu0 %v160
    %808 = vmatprep.subr.mxu0 0.0
    %809 = vmatpush1.msra.mxu0 %v161
    %810 = vmatprep.subr.mxu0 0.0
    %811 = vmatpush1.msra.mxu0 %v162
    %812 = vmatprep.subr.mxu0 0.0
    %813 = vmatpush1.msra.mxu0 0.0
    %814 = vmatprep.subr.mxu0 0.0
    %815 = vmatpush1.msra.mxu0 0.0
    %816 = vmatprep.subr.mxu0 0.0
    %817 = vmatpush1.msra.mxu0 0.0
    %818 = vmatprep.subr.mxu0 0.0
    %819 = vmatpush1.msra.mxu0 0.0
    %820 = vmatprep.subr.mxu0 0.0
    %821 = vmatpush1.msra.mxu0 0.0
    %822 = vmatprep.subr.mxu0 0.0
    %823 = vmatpush1.msra.mxu0 0.0
    %824 = vmatprep.subr.mxu0 0.0
    %825 = vmatpush1.msra.mxu0 0.0
    %826 = vmatprep.subr.mxu0 0.0
    %827 = vmatpush1.msra.mxu0 0.0
    %828 = vmatprep.subr.mxu0 0.0
    %829 = vmatpush1.msra.mxu0 0.0
    %830 = vmatprep.subr.mxu0 0.0
    %831 = vmatpush1.msra.mxu0 0.0
    %832 = vmatprep.subr.mxu0 0.0
    %833 = vmatpush1.msra.mxu0 0.0
    %834 = vmatprep.subr.mxu0 0.0
    %835 = vmatpush1.msra.mxu0 0.0
    %836 = vmatprep.subr.mxu0 0.0
    %837 = vmatpush1.msra.mxu0 0.0
    %838 = vmatprep.subr.mxu0 0.0
    %839 = vmatpush1.msra.mxu0 0.0
    %840 = vmatprep.subr.mxu0 0.0
    %841 = vmatpush1.msra.mxu0 0.0
    %842 = vmatprep.subr.mxu0 0.0
    %843 = vmatpush1.msra.mxu0 0.0
    %844 = vmatprep.subr.mxu0 0.0
    %845 = vmatpush1.msra.mxu0 0.0
    %846 = vmatprep.subr.mxu0 0.0
    %847 = vmatpush1.msra.mxu0 0.0
    %848 = vmatprep.subr.mxu0 0.0
    %849 = vmatpush1.msra.mxu0 0.0
    %850 = vmatprep.subr.mxu0 0.0
    %851 = vmatpush1.msra.mxu0 0.0
    %852 = vmatprep.subr.mxu0 0.0
    %853 = vmatpush1.msra.mxu0 0.0
    %854 = vmatprep.subr.mxu0 0.0
    %855 = vmatpush1.msra.mxu0 0.0
    %856 = vmatprep.subr.mxu0 0.0
    %857 = vmatpush1.msra.mxu0 0.0
    %858 = vmatprep.subr.mxu0 0.0
    %859 = vmatpush1.msra.mxu0 0.0
    %860 = vmatprep.subr.mxu0 0.0
    %861 = vmatpush1.msra.mxu0 0.0
    %862 = vmatprep.subr.mxu0 0.0
    %863 = vmatpush1.msra.mxu0 0.0
    %864 = vmatprep.subr.mxu0 0.0
    %865 = vmatpush1.msra.mxu0 0.0
    %866 = vmatprep.subr.mxu0 0.0
    %867 = vmatpush1.msra.mxu0 0.0
    %868 = vmatprep.mubr.f32.mxu0 0.0
    %869 = vmatmul.mubr.f32.gmra.mrb[0].mxu0 %v802
    %v870 = vpop.f32.mrb[0].mxu0
    %v871 = vadd.f32 0.0, %v870
    %v872 = vpop.f32.mrb[0].mxu0
    %873 = vdwg.mxu0
    %v874 = vadd.f32 %v287, %v871
    %v875 = vxor.u32 %v874, 2147483648
    %v876 = vmul.f32 %v875, 1.442695
    %v877 = vpow.pop %v876
    %v878 = vadd.f32 %v877, 1.0
    %v879 = vrcp.pop %v878
    %v880 = vmul.f32 1.0, %v879
    %v881 = vtanh.pop %v874
    %v882 = vmul.f32 %v880, %v792
    %884 = vrot.lane.b32.xlu0 %v881, 64
    %v885 = vpop.permute.xlu0 %884
    %v887 = vmul.f32 %v880, %v885
    %889 = vrot.lane.b32.xlu0 %v887, 32
    %v890 = vpop.permute.xlu0 %889
    %v892 = vadd.f32 %v882, %v890
    %v893 = vtanh.pop %v892
    %895 = vrot.lane.b32.xlu0 %v893, 64
    %v896 = vpop.permute.xlu0 %895
    %v898 = vmul.f32 %v880, %v896
    %900 = vrot.lane.b32.xlu0 %v898, 32
    %v901 = vpop.permute.xlu0 %900
    %v902 = vsel %vm300, %v901, 0
    %904 = vmatprep.subr.mxu0 0.0
    %905 = vmatpush1.msra.mxu0 %v159
    %906 = vmatprep.subr.mxu0 0.0
    %907 = vmatpush1.msra.mxu0 %v160
    %908 = vmatprep.subr.mxu0 0.0
    %909 = vmatpush1.msra.mxu0 %v161
    %910 = vmatprep.subr.mxu0 0.0
    %911 = vmatpush1.msra.mxu0 %v162
    %912 = vmatprep.subr.mxu0 0.0
    %913 = vmatpush1.msra.mxu0 0.0
    %914 = vmatprep.subr.mxu0 0.0
    %915 = vmatpush1.msra.mxu0 0.0
    %916 = vmatprep.subr.mxu0 0.0
    %917 = vmatpush1.msra.mxu0 0.0
    %918 = vmatprep.subr.mxu0 0.0
    %919 = vmatpush1.msra.mxu0 0.0
    %920 = vmatprep.subr.mxu0 0.0
    %921 = vmatpush1.msra.mxu0 0.0
    %922 = vmatprep.subr.mxu0 0.0
    %923 = vmatpush1.msra.mxu0 0.0
    %924 = vmatprep.subr.mxu0 0.0
    %925 = vmatpush1.msra.mxu0 0.0
    %926 = vmatprep.subr.mxu0 0.0
    %927 = vmatpush1.msra.mxu0 0.0
    %928 = vmatprep.subr.mxu0 0.0
    %929 = vmatpush1.msra.mxu0 0.0
    %930 = vmatprep.subr.mxu0 0.0
    %931 = vmatpush1.msra.mxu0 0.0
    %932 = vmatprep.subr.mxu0 0.0
    %933 = vmatpush1.msra.mxu0 0.0
    %934 = vmatprep.subr.mxu0 0.0
    %935 = vmatpush1.msra.mxu0 0.0
    %936 = vmatprep.subr.mxu0 0.0
    %937 = vmatpush1.msra.mxu0 0.0
    %938 = vmatprep.subr.mxu0 0.0
    %939 = vmatpush1.msra.mxu0 0.0
    %940 = vmatprep.subr.mxu0 0.0
    %941 = vmatpush1.msra.mxu0 0.0
    %942 = vmatprep.subr.mxu0 0.0
    %943 = vmatpush1.msra.mxu0 0.0
    %944 = vmatprep.subr.mxu0 0.0
    %945 = vmatpush1.msra.mxu0 0.0
    %946 = vmatprep.subr.mxu0 0.0
    %947 = vmatpush1.msra.mxu0 0.0
    %948 = vmatprep.subr.mxu0 0.0
    %949 = vmatpush1.msra.mxu0 0.0
    %950 = vmatprep.subr.mxu0 0.0
    %951 = vmatpush1.msra.mxu0 0.0
    %952 = vmatprep.subr.mxu0 0.0
    %953 = vmatpush1.msra.mxu0 0.0
    %954 = vmatprep.subr.mxu0 0.0
    %955 = vmatpush1.msra.mxu0 0.0
    %956 = vmatprep.subr.mxu0 0.0
    %957 = vmatpush1.msra.mxu0 0.0
    %958 = vmatprep.subr.mxu0 0.0
    %959 = vmatpush1.msra.mxu0 0.0
    %960 = vmatprep.subr.mxu0 0.0
    %961 = vmatpush1.msra.mxu0 0.0
    %962 = vmatprep.subr.mxu0 0.0
    %963 = vmatpush1.msra.mxu0 0.0
    %964 = vmatprep.subr.mxu0 0.0
    %965 = vmatpush1.msra.mxu0 0.0
    %966 = vmatprep.subr.mxu0 0.0
    %967 = vmatpush1.msra.mxu0 0.0
    %968 = vmatprep.mubr.f32.mxu0 0.0
    %969 = vmatmul.mubr.f32.gmra.mrb[0].mxu0 %v902
    %v970 = vpop.f32.mrb[0].mxu0
    %v971 = vadd.f32 0.0, %v970
    %v972 = vpop.f32.mrb[0].mxu0
    %973 = vdwg.mxu0
    %v974 = vadd.f32 %v292, %v971
    %v975 = vxor.u32 %v974, 2147483648
    %v976 = vmul.f32 %v975, 1.442695
    %v977 = vpow.pop %v976
    %v978 = vadd.f32 %v977, 1.0
    %v979 = vrcp.pop %v978
    %v980 = vmul.f32 1.0, %v979
    %v981 = vtanh.pop %v974
    %v982 = vmul.f32 %v980, %v892
    %984 = vrot.lane.b32.xlu0 %v981, 64
    %v985 = vpop.permute.xlu0 %984
    %v987 = vmul.f32 %v980, %v985
    %989 = vrot.lane.b32.xlu0 %v987, 32
    %v990 = vpop.permute.xlu0 %989
    %v992 = vadd.f32 %v982, %v990
    %v993 = vtanh.pop %v992
    %995 = vrot.lane.b32.xlu0 %v993, 64
    %v996 = vpop.permute.xlu0 %995
    %v998 = vmul.f32 %v980, %v996
    %1000 = vrot.lane.b32.xlu0 %v998, 32
    %v1001 = vpop.permute.xlu0 %1000
    %v1002 = vsel %vm300, %v1001, 0
    %1004 = vmatprep.subr.mxu0 0.0
    %1005 = vmatpush1.msra.mxu0 %v159
    %1006 = vmatprep.subr.mxu0 0.0
    %1007 = vmatpush1.msra.mxu0 %v160
    %1008 = vmatprep.subr.mxu0 0.0
    %1009 = vmatpush1.msra.mxu0 %v161
    %1010 = vmatprep.subr.mxu0 0.0
    %1011 = vmatpush1.msra.mxu0 %v162
    %1012 = vmatprep.subr.mxu0 0.0
    %1013 = vmatpush1.msra.mxu0 0.0
    %1014 = vmatprep.subr.mxu0 0.0
    %1015 = vmatpush1.msra.mxu0 0.0
    %1016 = vmatprep.subr.mxu0 0.0
    %1017 = vmatpush1.msra.mxu0 0.0
    %1018 = vmatprep.subr.mxu0 0.0
    %1019 = vmatpush1.msra.mxu0 0.0
    %1020 = vmatprep.subr.mxu0 0.0
    %1021 = vmatpush1.msra.mxu0 0.0
    %1022 = vmatprep.subr.mxu0 0.0
    %1023 = vmatpush1.msra.mxu0 0.0
    %1024 = vmatprep.subr.mxu0 0.0
    %1025 = vmatpush1.msra.mxu0 0.0
    %1026 = vmatprep.subr.mxu0 0.0
    %1027 = vmatpush1.msra.mxu0 0.0
    %1028 = vmatprep.subr.mxu0 0.0
    %1029 = vmatpush1.msra.mxu0 0.0
    %1030 = vmatprep.subr.mxu0 0.0
    %1031 = vmatpush1.msra.mxu0 0.0
    %1032 = vmatprep.subr.mxu0 0.0
    %1033 = vmatpush1.msra.mxu0 0.0
    %1034 = vmatprep.subr.mxu0 0.0
    %1035 = vmatpush1.msra.mxu0 0.0
    %1036 = vmatprep.subr.mxu0 0.0
    %1037 = vmatpush1.msra.mxu0 0.0
    %1038 = vmatprep.subr.mxu0 0.0
    %1039 = vmatpush1.msra.mxu0 0.0
    %1040 = vmatprep.subr.mxu0 0.0
    %1041 = vmatpush1.msra.mxu0 0.0
    %1042 = vmatprep.subr.mxu0 0.0
    %1043 = vmatpush1.msra.mxu0 0.0
    %1044 = vmatprep.subr.mxu0 0.0
    %1045 = vmatpush1.msra.mxu0 0.0
    %1046 = vmatprep.subr.mxu0 0.0
    %1047 = vmatpush1.msra.mxu0 0.0
    %1048 = vmatprep.subr.mxu0 0.0
    %1049 = vmatpush1.msra.mxu0 0.0
    %1050 = vmatprep.subr.mxu0 0.0
    %1051 = vmatpush1.msra.mxu0 0.0
    %1052 = vmatprep.subr.mxu0 0.0
    %1053 = vmatpush1.msra.mxu0 0.0
    %1054 = vmatprep.subr.mxu0 0.0
    %1055 = vmatpush1.msra.mxu0 0.0
    %1056 = vmatprep.subr.mxu0 0.0
    %1057 = vmatpush1.msra.mxu0 0.0
    %1058 = vmatprep.subr.mxu0 0.0
    %1059 = vmatpush1.msra.mxu0 0.0
    %1060 = vmatprep.subr.mxu0 0.0
    %1061 = vmatpush1.msra.mxu0 0.0
    %1062 = vmatprep.subr.mxu0 0.0
    %1063 = vmatpush1.msra.mxu0 0.0
    %1064 = vmatprep.subr.mxu0 0.0
    %1065 = vmatpush1.msra.mxu0 0.0
    %1066 = vmatprep.subr.mxu0 0.0
    %1067 = vmatpush1.msra.mxu0 0.0
    %1068 = vmatprep.mubr.f32.mxu0 0.0
    %1069 = vmatmul.mubr.f32.gmra.mrb[0].mxu0 %v1002
    %v1070 = vpop.f32.mrb[0].mxu0
    %v1071 = vadd.f32 0.0, %v1070
    %v1072 = vpop.f32.mrb[0].mxu0
    %1073 = vdwg.mxu0
    %v1074 = vadd.f32 %v297, %v1071
    %v1075 = vxor.u32 %v1074, 2147483648
    %v1076 = vmul.f32 %v1075, 1.442695
    %v1077 = vpow.pop %v1076
    %v1078 = vadd.f32 %v1077, 1.0
    %v1079 = vrcp.pop %v1078
    %v1080 = vmul.f32 1.0, %v1079
    %v1081 = vtanh.pop %v1074
    %v1082 = vmul.f32 %v1080, %v992
    %1084 = vrot.lane.b32.xlu0 %v1081, 64
    %v1085 = vpop.permute.xlu0 %1084
    %v1087 = vmul.f32 %v1080, %v1085
    %1089 = vrot.lane.b32.xlu0 %v1087, 32
    %v1090 = vpop.permute.xlu0 %1089
    %v1092 = vadd.f32 %v1082, %v1090
    %v1093 = vtanh.pop %v1092
    %1095 = vrot.lane.b32.xlu0 %v1093, 64
    %v1096 = vpop.permute.xlu0 %1095
    %v1098 = vmul.f32 %v1080, %v1096
    %v1099 = vld [vmem:[#allocation10] sm:$0xff]
    %v1100 = vld [vmem:[#allocation10 + $0x8] sm:$0xff]
    %v1101 = vld [vmem:[#allocation10 + $0x10] sm:$0xff]
    %v1102 = vld [vmem:[#allocation10 + $0x18] sm:$0xff]
    %v1103 = vld [vmem:[#allocation11] sm:$0xff]
    %v1104 = vld [vmem:[#allocation11 + $0x8] sm:$0xff]
    %v1105 = vld [vmem:[#allocation11 + $0x10] sm:$0xff]
    %v1106 = vld [vmem:[#allocation11 + $0x18] sm:$0xff]
    %v1107 = vld [vmem:[#allocation13] sm:$0x1]
    %v1109 = vlaneseq
    %v1110 = vshrl.u32 %v1109, 7
    %v1111 = vsub.s32 0, %v1110
    %v1112 = vrot.slane %v1107, %v1111
    %1115 = vrot.lane.b32.xlu0 %v1098, 32
    %v1116 = vpop.permute.xlu0 %1115
    %v1117 = vsel %vm300, %v1116, 0
    %1119 = vmatprep.subr.mxu0 0.0
    %1120 = vmatpush1.msra.mxu0 %v1099
    %1121 = vmatprep.subr.mxu0 0.0
    %1122 = vmatpush1.msra.mxu0 %v1100
    %1123 = vmatprep.subr.mxu0 0.0
    %1124 = vmatpush1.msra.mxu0 %v1101
    %1125 = vmatprep.subr.mxu0 0.0
    %1126 = vmatpush1.msra.mxu0 %v1102
    %1127 = vmatprep.subr.mxu0 0.0
    %1128 = vmatpush1.msra.mxu0 0.0
    %1129 = vmatprep.subr.mxu0 0.0
    %1130 = vmatpush1.msra.mxu0 0.0
    %1131 = vmatprep.subr.mxu0 0.0
    %1132 = vmatpush1.msra.mxu0 0.0
    %1133 = vmatprep.subr.mxu0 0.0
    %1134 = vmatpush1.msra.mxu0 0.0
    %1135 = vmatprep.subr.mxu0 0.0
    %1136 = vmatpush1.msra.mxu0 0.0
    %1137 = vmatprep.subr.mxu0 0.0
    %1138 = vmatpush1.msra.mxu0 0.0
    %1139 = vmatprep.subr.mxu0 0.0
    %1140 = vmatpush1.msra.mxu0 0.0
    %1141 = vmatprep.subr.mxu0 0.0
    %1142 = vmatpush1.msra.mxu0 0.0
    %1143 = vmatprep.subr.mxu0 0.0
    %1144 = vmatpush1.msra.mxu0 0.0
    %1145 = vmatprep.subr.mxu0 0.0
    %1146 = vmatpush1.msra.mxu0 0.0
    %1147 = vmatprep.subr.mxu0 0.0
    %1148 = vmatpush1.msra.mxu0 0.0
    %1149 = vmatprep.subr.mxu0 0.0
    %1150 = vmatpush1.msra.mxu0 0.0
    %1151 = vmatprep.subr.mxu0 0.0
    %1152 = vmatpush1.msra.mxu0 0.0
    %1153 = vmatprep.subr.mxu0 0.0
    %1154 = vmatpush1.msra.mxu0 0.0
    %1155 = vmatprep.subr.mxu0 0.0
    %1156 = vmatpush1.msra.mxu0 0.0
    %1157 = vmatprep.subr.mxu0 0.0
    %1158 = vmatpush1.msra.mxu0 0.0
    %1159 = vmatprep.subr.mxu0 0.0
    %1160 = vmatpush1.msra.mxu0 0.0
    %1161 = vmatprep.subr.mxu0 0.0
    %1162 = vmatpush1.msra.mxu0 0.0
    %1163 = vmatprep.subr.mxu0 0.0
    %1164 = vmatpush1.msra.mxu0 0.0
    %1165 = vmatprep.subr.mxu0 0.0
    %1166 = vmatpush1.msra.mxu0 0.0
    %1167 = vmatprep.subr.mxu0 0.0
    %1168 = vmatpush1.msra.mxu0 0.0
    %1169 = vmatprep.subr.mxu0 0.0
    %1170 = vmatpush1.msra.mxu0 0.0
    %1171 = vmatprep.subr.mxu0 0.0
    %1172 = vmatpush1.msra.mxu0 0.0
    %1173 = vmatprep.subr.mxu0 0.0
    %1174 = vmatpush1.msra.mxu0 0.0
    %1175 = vmatprep.subr.mxu0 0.0
    %1176 = vmatpush1.msra.mxu0 0.0
    %1177 = vmatprep.subr.mxu0 0.0
    %1178 = vmatpush1.msra.mxu0 0.0
    %1179 = vmatprep.subr.mxu0 0.0
    %1180 = vmatpush1.msra.mxu0 0.0
    %1181 = vmatprep.subr.mxu0 0.0
    %1182 = vmatpush1.msra.mxu0 0.0
    %1183 = vmatprep.mubr.f32.mxu0 0.0
    %1184 = vmatmul.mubr.f32.gmra.mrb[0].mxu0 %v402
    %v1185 = vpop.f32.mrb[0].mxu0
    %v1186 = vadd.f32 %v1112, %v1185
    %v1187 = vpop.f32.mrb[0].mxu0
    %1188 = vmatprep.mubr.f32.mxu0 0.0
    %1189 = vmatmul.mubr.f32.gmra.mrb[0].mxu0 %v502
    %v1190 = vpop.f32.mrb[0].mxu0
    %v1191 = vadd.f32 %v1112, %v1190
    %v1192 = vpop.f32.mrb[0].mxu0
    %1193 = vmatprep.mubr.f32.mxu0 0.0
    %1194 = vmatmul.mubr.f32.gmra.mrb[0].mxu0 %v602
    %v1195 = vpop.f32.mrb[0].mxu0
    %v1196 = vadd.f32 %v1112, %v1195
    %v1197 = vpop.f32.mrb[0].mxu0
    %1198 = vmatprep.mubr.f32.mxu0 0.0
    %1199 = vmatmul.mubr.f32.gmra.mrb[0].mxu0 %v702
    %v1200 = vpop.f32.mrb[0].mxu0
    %v1201 = vadd.f32 %v1112, %v1200
    %v1202 = vpop.f32.mrb[0].mxu0
    %1203 = vmatprep.mubr.f32.mxu0 0.0
    %1204 = vmatmul.mubr.f32.gmra.mrb[0].mxu0 %v802
    %v1205 = vpop.f32.mrb[0].mxu0
    %v1206 = vadd.f32 %v1112, %v1205
    %v1207 = vpop.f32.mrb[0].mxu0
    %1208 = vmatprep.mubr.f32.mxu0 0.0
    %1209 = vmatmul.mubr.f32.gmra.mrb[0].mxu0 %v902
    %v1210 = vpop.f32.mrb[0].mxu0
    %v1211 = vadd.f32 %v1112, %v1210
    %v1212 = vpop.f32.mrb[0].mxu0
    %1213 = vmatprep.mubr.f32.mxu0 0.0
    %1214 = vmatmul.mubr.f32.gmra.mrb[0].mxu0 %v1002
    %v1215 = vpop.f32.mrb[0].mxu0
    %v1216 = vadd.f32 %v1112, %v1215
    %v1217 = vpop.f32.mrb[0].mxu0
    %1218 = vmatprep.mubr.f32.mxu0 0.0
    %1219 = vmatmul.mubr.f32.gmra.mrb[0].mxu0 %v1117
    %v1220 = vpop.f32.mrb[0].mxu0
    %v1221 = vadd.f32 %v1112, %v1220
    %v1222 = vpop.f32.mrb[0].mxu0
    %1223 = vdwg.mxu0
    %1224 = vmatprep.subr.mxu0 0.0
    %1225 = vmatpush1.msra.mxu0 %v1103
    %1226 = vmatprep.subr.mxu0 0.0
    %1227 = vmatpush1.msra.mxu0 %v1104
    %1228 = vmatprep.subr.mxu0 0.0
    %1229 = vmatpush1.msra.mxu0 %v1105
    %1230 = vmatprep.subr.mxu0 0.0
    %1231 = vmatpush1.msra.mxu0 %v1106
    %1232 = vmatprep.subr.mxu0 0.0
    %1233 = vmatpush1.msra.mxu0 0.0
    %1234 = vmatprep.subr.mxu0 0.0
    %1235 = vmatpush1.msra.mxu0 0.0
    %1236 = vmatprep.subr.mxu0 0.0
    %1237 = vmatpush1.msra.mxu0 0.0
    %1238 = vmatprep.subr.mxu0 0.0
    %1239 = vmatpush1.msra.mxu0 0.0
    %1240 = vmatprep.subr.mxu0 0.0
    %1241 = vmatpush1.msra.mxu0 0.0
    %1242 = vmatprep.subr.mxu0 0.0
    %1243 = vmatpush1.msra.mxu0 0.0
    %1244 = vmatprep.subr.mxu0 0.0
    %1245 = vmatpush1.msra.mxu0 0.0
    %1246 = vmatprep.subr.mxu0 0.0
    %1247 = vmatpush1.msra.mxu0 0.0
    %1248 = vmatprep.subr.mxu0 0.0
    %1249 = vmatpush1.msra.mxu0 0.0
    %1250 = vmatprep.subr.mxu0 0.0
    %1251 = vmatpush1.msra.mxu0 0.0
    %1252 = vmatprep.subr.mxu0 0.0
    %1253 = vmatpush1.msra.mxu0 0.0
    %1254 = vmatprep.subr.mxu0 0.0
    %1255 = vmatpush1.msra.mxu0 0.0
    %1256 = vmatprep.subr.mxu0 0.0
    %1257 = vmatpush1.msra.mxu0 0.0
    %1258 = vmatprep.subr.mxu0 0.0
    %1259 = vmatpush1.msra.mxu0 0.0
    %1260 = vmatprep.subr.mxu0 0.0
    %1261 = vmatpush1.msra.mxu0 0.0
    %1262 = vmatprep.subr.mxu0 0.0
    %1263 = vmatpush1.msra.mxu0 0.0
    %1264 = vmatprep.subr.mxu0 0.0
    %1265 = vmatpush1.msra.mxu0 0.0
    %1266 = vmatprep.subr.mxu0 0.0
    %1267 = vmatpush1.msra.mxu0 0.0
    %1268 = vmatprep.subr.mxu0 0.0
    %1269 = vmatpush1.msra.mxu0 0.0
    %1270 = vmatprep.subr.mxu0 0.0
    %1271 = vmatpush1.msra.mxu0 0.0
    %1272 = vmatprep.subr.mxu0 0.0
    %1273 = vmatpush1.msra.mxu0 0.0
    %1274 = vmatprep.subr.mxu0 0.0
    %1275 = vmatpush1.msra.mxu0 0.0
    %1276 = vmatprep.subr.mxu0 0.0
    %1277 = vmatpush1.msra.mxu0 0.0
    %1278 = vmatprep.subr.mxu0 0.0
    %1279 = vmatpush1.msra.mxu0 0.0
    %1280 = vmatprep.subr.mxu0 0.0
    %1281 = vmatpush1.msra.mxu0 0.0
    %1282 = vmatprep.subr.mxu0 0.0
    %1283 = vmatpush1.msra.mxu0 0.0
    %1284 = vmatprep.subr.mxu0 0.0
    %1285 = vmatpush1.msra.mxu0 0.0
    %1286 = vmatprep.subr.mxu0 0.0
    %1287 = vmatpush1.msra.mxu0 0.0
    %1288 = vmatprep.mubr.f32.mxu0 0.0
    %1289 = vmatmul.mubr.f32.gmra.mrb[0].mxu0 %v302
    %v1290 = vpop.f32.mrb[0].mxu0
    %v1291 = vadd.f32 0.0, %v1290
    %v1292 = vpop.f32.mrb[0].mxu0
    %1293 = vdwg.mxu0
    %v1294 = vadd.f32 %v1186, %v1291
    %v1295 = vxor.u32 %v1294, 2147483648
    %v1296 = vmul.f32 %v1295, 1.442695
    %v1297 = vpow.pop %v1296
    %v1298 = vadd.f32 %v1297, 1.0
    %v1299 = vrcp.pop %v1298
    %v1300 = vmul.f32 1.0, %v1299
    %v1301 = vtanh.pop %v1294
    %v1302 = vmul.f32 %v1300, 0.0
    %1304 = vrot.lane.b32.xlu0 %v1301, 64
    %v1305 = vpop.permute.xlu0 %1304
    %v1307 = vmul.f32 %v1300, %v1305
    %1309 = vrot.lane.b32.xlu0 %v1307, 32
    %v1310 = vpop.permute.xlu0 %1309
    %v1312 = vadd.f32 %v1302, %v1310
    %v1313 = vtanh.pop %v1312
    %1315 = vrot.lane.b32.xlu0 %v1313, 64
    %v1316 = vpop.permute.xlu0 %1315
    %v1318 = vmul.f32 %v1300, %v1316
    %1320 = vrot.lane.b32.xlu0 %v1318, 32
    %v1321 = vpop.permute.xlu0 %1320
    %v1322 = vsel %vm300, %v1321, 0
    %1324 = vmatprep.subr.mxu0 0.0
    %1325 = vmatpush1.msra.mxu0 %v1103
    %1326 = vmatprep.subr.mxu0 0.0
    %1327 = vmatpush1.msra.mxu0 %v1104
    %1328 = vmatprep.subr.mxu0 0.0
    %1329 = vmatpush1.msra.mxu0 %v1105
    %1330 = vmatprep.subr.mxu0 0.0
    %1331 = vmatpush1.msra.mxu0 %v1106
    %1332 = vmatprep.subr.mxu0 0.0
    %1333 = vmatpush1.msra.mxu0 0.0
    %1334 = vmatprep.subr.mxu0 0.0
    %1335 = vmatpush1.msra.mxu0 0.0
    %1336 = vmatprep.subr.mxu0 0.0
    %1337 = vmatpush1.msra.mxu0 0.0
    %1338 = vmatprep.subr.mxu0 0.0
    %1339 = vmatpush1.msra.mxu0 0.0
    %1340 = vmatprep.subr.mxu0 0.0
    %1341 = vmatpush1.msra.mxu0 0.0
    %1342 = vmatprep.subr.mxu0 0.0
    %1343 = vmatpush1.msra.mxu0 0.0
    %1344 = vmatprep.subr.mxu0 0.0
    %1345 = vmatpush1.msra.mxu0 0.0
    %1346 = vmatprep.subr.mxu0 0.0
    %1347 = vmatpush1.msra.mxu0 0.0
    %1348 = vmatprep.subr.mxu0 0.0
    %1349 = vmatpush1.msra.mxu0 0.0
    %1350 = vmatprep.subr.mxu0 0.0
    %1351 = vmatpush1.msra.mxu0 0.0
    %1352 = vmatprep.subr.mxu0 0.0
    %1353 = vmatpush1.msra.mxu0 0.0
    %1354 = vmatprep.subr.mxu0 0.0
    %1355 = vmatpush1.msra.mxu0 0.0
    %1356 = vmatprep.subr.mxu0 0.0
    %1357 = vmatpush1.msra.mxu0 0.0
    %1358 = vmatprep.subr.mxu0 0.0
    %1359 = vmatpush1.msra.mxu0 0.0
    %1360 = vmatprep.subr.mxu0 0.0
    %1361 = vmatpush1.msra.mxu0 0.0
    %1362 = vmatprep.subr.mxu0 0.0
    %1363 = vmatpush1.msra.mxu0 0.0
    %1364 = vmatprep.subr.mxu0 0.0
    %1365 = vmatpush1.msra.mxu0 0.0
    %1366 = vmatprep.subr.mxu0 0.0
    %1367 = vmatpush1.msra.mxu0 0.0
    %1368 = vmatprep.subr.mxu0 0.0
    %1369 = vmatpush1.msra.mxu0 0.0
    %1370 = vmatprep.subr.mxu0 0.0
    %1371 = vmatpush1.msra.mxu0 0.0
    %1372 = vmatprep.subr.mxu0 0.0
    %1373 = vmatpush1.msra.mxu0 0.0
    %1374 = vmatprep.subr.mxu0 0.0
    %1375 = vmatpush1.msra.mxu0 0.0
    %1376 = vmatprep.subr.mxu0 0.0
    %1377 = vmatpush1.msra.mxu0 0.0
    %1378 = vmatprep.subr.mxu0 0.0
    %1379 = vmatpush1.msra.mxu0 0.0
    %1380 = vmatprep.subr.mxu0 0.0
    %1381 = vmatpush1.msra.mxu0 0.0
    %1382 = vmatprep.subr.mxu0 0.0
    %1383 = vmatpush1.msra.mxu0 0.0
    %1384 = vmatprep.subr.mxu0 0.0
    %1385 = vmatpush1.msra.mxu0 0.0
    %1386 = vmatprep.subr.mxu0 0.0
    %1387 = vmatpush1.msra.mxu0 0.0
    %1388 = vmatprep.mubr.f32.mxu0 0.0
    %1389 = vmatmul.mubr.f32.gmra.mrb[0].mxu0 %v1322
    %v1390 = vpop.f32.mrb[0].mxu0
    %v1391 = vadd.f32 0.0, %v1390
    %v1392 = vpop.f32.mrb[0].mxu0
    %1393 = vdwg.mxu0
    %v1394 = vadd.f32 %v1191, %v1391
    %v1395 = vxor.u32 %v1394, 2147483648
    %v1396 = vmul.f32 %v1395, 1.442695
    %v1397 = vpow.pop %v1396
    %v1398 = vadd.f32 %v1397, 1.0
    %v1399 = vrcp.pop %v1398
    %v1400 = vmul.f32 1.0, %v1399
    %v1401 = vtanh.pop %v1394
    %v1402 = vmul.f32 %v1400, %v1312
    %1404 = vrot.lane.b32.xlu0 %v1401, 64
    %v1405 = vpop.permute.xlu0 %1404
    %v1407 = vmul.f32 %v1400, %v1405
    %1409 = vrot.lane.b32.xlu0 %v1407, 32
    %v1410 = vpop.permute.xlu0 %1409
    %v1412 = vadd.f32 %v1402, %v1410
    %v1413 = vtanh.pop %v1412
    %1415 = vrot.lane.b32.xlu0 %v1413, 64
    %v1416 = vpop.permute.xlu0 %1415
    %v1418 = vmul.f32 %v1400, %v1416
    %1420 = vrot.lane.b32.xlu0 %v1418, 32
    %v1421 = vpop.permute.xlu0 %1420
    %v1422 = vsel %vm300, %v1421, 0
    %1424 = vmatprep.subr.mxu0 0.0
    %1425 = vmatpush1.msra.mxu0 %v1103
    %1426 = vmatprep.subr.mxu0 0.0
    %1427 = vmatpush1.msra.mxu0 %v1104
    %1428 = vmatprep.subr.mxu0 0.0
    %1429 = vmatpush1.msra.mxu0 %v1105
    %1430 = vmatprep.subr.mxu0 0.0
    %1431 = vmatpush1.msra.mxu0 %v1106
    %1432 = vmatprep.subr.mxu0 0.0
    %1433 = vmatpush1.msra.mxu0 0.0
    %1434 = vmatprep.subr.mxu0 0.0
    %1435 = vmatpush1.msra.mxu0 0.0
    %1436 = vmatprep.subr.mxu0 0.0
    %1437 = vmatpush1.msra.mxu0 0.0
    %1438 = vmatprep.subr.mxu0 0.0
    %1439 = vmatpush1.msra.mxu0 0.0
    %1440 = vmatprep.subr.mxu0 0.0
    %1441 = vmatpush1.msra.mxu0 0.0
    %1442 = vmatprep.subr.mxu0 0.0
    %1443 = vmatpush1.msra.mxu0 0.0
    %1444 = vmatprep.subr.mxu0 0.0
    %1445 = vmatpush1.msra.mxu0 0.0
    %1446 = vmatprep.subr.mxu0 0.0
    %1447 = vmatpush1.msra.mxu0 0.0
    %1448 = vmatprep.subr.mxu0 0.0
    %1449 = vmatpush1.msra.mxu0 0.0
    %1450 = vmatprep.subr.mxu0 0.0
    %1451 = vmatpush1.msra.mxu0 0.0
    %1452 = vmatprep.subr.mxu0 0.0
    %1453 = vmatpush1.msra.mxu0 0.0
    %1454 = vmatprep.subr.mxu0 0.0
    %1455 = vmatpush1.msra.mxu0 0.0
    %1456 = vmatprep.subr.mxu0 0.0
    %1457 = vmatpush1.msra.mxu0 0.0
    %1458 = vmatprep.subr.mxu0 0.0
    %1459 = vmatpush1.msra.mxu0 0.0
    %1460 = vmatprep.subr.mxu0 0.0
    %1461 = vmatpush1.msra.mxu0 0.0
    %1462 = vmatprep.subr.mxu0 0.0
    %1463 = vmatpush1.msra.mxu0 0.0
    %1464 = vmatprep.subr.mxu0 0.0
    %1465 = vmatpush1.msra.mxu0 0.0
    %1466 = vmatprep.subr.mxu0 0.0
    %1467 = vmatpush1.msra.mxu0 0.0
    %1468 = vmatprep.subr.mxu0 0.0
    %1469 = vmatpush1.msra.mxu0 0.0
    %1470 = vmatprep.subr.mxu0 0.0
    %1471 = vmatpush1.msra.mxu0 0.0
    %1472 = vmatprep.subr.mxu0 0.0
    %1473 = vmatpush1.msra.mxu0 0.0
    %1474 = vmatprep.subr.mxu0 0.0
    %1475 = vmatpush1.msra.mxu0 0.0
    %1476 = vmatprep.subr.mxu0 0.0
    %1477 = vmatpush1.msra.mxu0 0.0
    %1478 = vmatprep.subr.mxu0 0.0
    %1479 = vmatpush1.msra.mxu0 0.0
    %1480 = vmatprep.subr.mxu0 0.0
    %1481 = vmatpush1.msra.mxu0 0.0
    %1482 = vmatprep.subr.mxu0 0.0
    %1483 = vmatpush1.msra.mxu0 0.0
    %1484 = vmatprep.subr.mxu0 0.0
    %1485 = vmatpush1.msra.mxu0 0.0
    %1486 = vmatprep.subr.mxu0 0.0
    %1487 = vmatpush1.msra.mxu0 0.0
    %1488 = vmatprep.mubr.f32.mxu0 0.0
    %1489 = vmatmul.mubr.f32.gmra.mrb[0].mxu0 %v1422
    %v1490 = vpop.f32.mrb[0].mxu0
    %v1491 = vadd.f32 0.0, %v1490
    %v1492 = vpop.f32.mrb[0].mxu0
    %1493 = vdwg.mxu0
    %v1494 = vadd.f32 %v1196, %v1491
    %v1495 = vxor.u32 %v1494, 2147483648
    %v1496 = vmul.f32 %v1495, 1.442695
    %v1497 = vpow.pop %v1496
    %v1498 = vadd.f32 %v1497, 1.0
    %v1499 = vrcp.pop %v1498
    %v1500 = vmul.f32 1.0, %v1499
    %v1501 = vtanh.pop %v1494
    %v1502 = vmul.f32 %v1500, %v1412
    %1504 = vrot.lane.b32.xlu0 %v1501, 64
    %v1505 = vpop.permute.xlu0 %1504
    %v1507 = vmul.f32 %v1500, %v1505
    %1509 = vrot.lane.b32.xlu0 %v1507, 32
    %v1510 = vpop.permute.xlu0 %1509
    %v1512 = vadd.f32 %v1502, %v1510
    %v1513 = vtanh.pop %v1512
    %1515 = vrot.lane.b32.xlu0 %v1513, 64
    %v1516 = vpop.permute.xlu0 %1515
    %v1518 = vmul.f32 %v1500, %v1516
    %1520 = vrot.lane.b32.xlu0 %v1518, 32
    %v1521 = vpop.permute.xlu0 %1520
    %v1522 = vsel %vm300, %v1521, 0
    %1524 = vmatprep.subr.mxu0 0.0
    %1525 = vmatpush1.msra.mxu0 %v1103
    %1526 = vmatprep.subr.mxu0 0.0
    %1527 = vmatpush1.msra.mxu0 %v1104
    %1528 = vmatprep.subr.mxu0 0.0
    %1529 = vmatpush1.msra.mxu0 %v1105
    %1530 = vmatprep.subr.mxu0 0.0
    %1531 = vmatpush1.msra.mxu0 %v1106
    %1532 = vmatprep.subr.mxu0 0.0
    %1533 = vmatpush1.msra.mxu0 0.0
    %1534 = vmatprep.subr.mxu0 0.0
    %1535 = vmatpush1.msra.mxu0 0.0
    %1536 = vmatprep.subr.mxu0 0.0
    %1537 = vmatpush1.msra.mxu0 0.0
    %1538 = vmatprep.subr.mxu0 0.0
    %1539 = vmatpush1.msra.mxu0 0.0
    %1540 = vmatprep.subr.mxu0 0.0
    %1541 = vmatpush1.msra.mxu0 0.0
    %1542 = vmatprep.subr.mxu0 0.0
    %1543 = vmatpush1.msra.mxu0 0.0
    %1544 = vmatprep.subr.mxu0 0.0
    %1545 = vmatpush1.msra.mxu0 0.0
    %1546 = vmatprep.subr.mxu0 0.0
    %1547 = vmatpush1.msra.mxu0 0.0
    %1548 = vmatprep.subr.mxu0 0.0
    %1549 = vmatpush1.msra.mxu0 0.0
    %1550 = vmatprep.subr.mxu0 0.0
    %1551 = vmatpush1.msra.mxu0 0.0
    %1552 = vmatprep.subr.mxu0 0.0
    %1553 = vmatpush1.msra.mxu0 0.0
    %1554 = vmatprep.subr.mxu0 0.0
    %1555 = vmatpush1.msra.mxu0 0.0
    %1556 = vmatprep.subr.mxu0 0.0
    %1557 = vmatpush1.msra.mxu0 0.0
    %1558 = vmatprep.subr.mxu0 0.0
    %1559 = vmatpush1.msra.mxu0 0.0
    %1560 = vmatprep.subr.mxu0 0.0
    %1561 = vmatpush1.msra.mxu0 0.0
    %1562 = vmatprep.subr.mxu0 0.0
    %1563 = vmatpush1.msra.mxu0 0.0
    %1564 = vmatprep.subr.mxu0 0.0
    %1565 = vmatpush1.msra.mxu0 0.0
    %1566 = vmatprep.subr.mxu0 0.0
    %1567 = vmatpush1.msra.mxu0 0.0
    %1568 = vmatprep.subr.mxu0 0.0
    %1569 = vmatpush1.msra.mxu0 0.0
    %1570 = vmatprep.subr.mxu0 0.0
    %1571 = vmatpush1.msra.mxu0 0.0
    %1572 = vmatprep.subr.mxu0 0.0
    %1573 = vmatpush1.msra.mxu0 0.0
    %1574 = vmatprep.subr.mxu0 0.0
    %1575 = vmatpush1.msra.mxu0 0.0
    %1576 = vmatprep.subr.mxu0 0.0
    %1577 = vmatpush1.msra.mxu0 0.0
    %1578 = vmatprep.subr.mxu0 0.0
    %1579 = vmatpush1.msra.mxu0 0.0
    %1580 = vmatprep.subr.mxu0 0.0
    %1581 = vmatpush1.msra.mxu0 0.0
    %1582 = vmatprep.subr.mxu0 0.0
    %1583 = vmatpush1.msra.mxu0 0.0
    %1584 = vmatprep.subr.mxu0 0.0
    %1585 = vmatpush1.msra.mxu0 0.0
    %1586 = vmatprep.subr.mxu0 0.0
    %1587 = vmatpush1.msra.mxu0 0.0
    %1588 = vmatprep.mubr.f32.mxu0 0.0
    %1589 = vmatmul.mubr.f32.gmra.mrb[0].mxu0 %v1522
    %v1590 = vpop.f32.mrb[0].mxu0
    %v1591 = vadd.f32 0.0, %v1590
    %v1592 = vpop.f32.mrb[0].mxu0
    %1593 = vdwg.mxu0
    %v1594 = vadd.f32 %v1201, %v1591
    %v1595 = vxor.u32 %v1594, 2147483648
    %v1596 = vmul.f32 %v1595, 1.442695
    %v1597 = vpow.pop %v1596
    %v1598 = vadd.f32 %v1597, 1.0
    %v1599 = vrcp.pop %v1598
    %v1600 = vmul.f32 1.0, %v1599
    %v1601 = vtanh.pop %v1594
    %v1602 = vmul.f32 %v1600, %v1512
    %1604 = vrot.lane.b32.xlu0 %v1601, 64
    %v1605 = vpop.permute.xlu0 %1604
    %v1607 = vmul.f32 %v1600, %v1605
    %1609 = vrot.lane.b32.xlu0 %v1607, 32
    %v1610 = vpop.permute.xlu0 %1609
    %v1612 = vadd.f32 %v1602, %v1610
    %v1613 = vtanh.pop %v1612
    %1615 = vrot.lane.b32.xlu0 %v1613, 64
    %v1616 = vpop.permute.xlu0 %1615
    %v1618 = vmul.f32 %v1600, %v1616
    %1620 = vrot.lane.b32.xlu0 %v1618, 32
    %v1621 = vpop.permute.xlu0 %1620
    %v1622 = vsel %vm300, %v1621, 0
    %1624 = vmatprep.subr.mxu0 0.0
    %1625 = vmatpush1.msra.mxu0 %v1103
    %1626 = vmatprep.subr.mxu0 0.0
    %1627 = vmatpush1.msra.mxu0 %v1104
    %1628 = vmatprep.subr.mxu0 0.0
    %1629 = vmatpush1.msra.mxu0 %v1105
    %1630 = vmatprep.subr.mxu0 0.0
    %1631 = vmatpush1.msra.mxu0 %v1106
    %1632 = vmatprep.subr.mxu0 0.0
    %1633 = vmatpush1.msra.mxu0 0.0
    %1634 = vmatprep.subr.mxu0 0.0
    %1635 = vmatpush1.msra.mxu0 0.0
    %1636 = vmatprep.subr.mxu0 0.0
    %1637 = vmatpush1.msra.mxu0 0.0
    %1638 = vmatprep.subr.mxu0 0.0
    %1639 = vmatpush1.msra.mxu0 0.0
    %1640 = vmatprep.subr.mxu0 0.0
    %1641 = vmatpush1.msra.mxu0 0.0
    %1642 = vmatprep.subr.mxu0 0.0
    %1643 = vmatpush1.msra.mxu0 0.0
    %1644 = vmatprep.subr.mxu0 0.0
    %1645 = vmatpush1.msra.mxu0 0.0
    %1646 = vmatprep.subr.mxu0 0.0
    %1647 = vmatpush1.msra.mxu0 0.0
    %1648 = vmatprep.subr.mxu0 0.0
    %1649 = vmatpush1.msra.mxu0 0.0
    %1650 = vmatprep.subr.mxu0 0.0
    %1651 = vmatpush1.msra.mxu0 0.0
    %1652 = vmatprep.subr.mxu0 0.0
    %1653 = vmatpush1.msra.mxu0 0.0
    %1654 = vmatprep.subr.mxu0 0.0
    %1655 = vmatpush1.msra.mxu0 0.0
    %1656 = vmatprep.subr.mxu0 0.0
    %1657 = vmatpush1.msra.mxu0 0.0
    %1658 = vmatprep.subr.mxu0 0.0
    %1659 = vmatpush1.msra.mxu0 0.0
    %1660 = vmatprep.subr.mxu0 0.0
    %1661 = vmatpush1.msra.mxu0 0.0
    %1662 = vmatprep.subr.mxu0 0.0
    %1663 = vmatpush1.msra.mxu0 0.0
    %1664 = vmatprep.subr.mxu0 0.0
    %1665 = vmatpush1.msra.mxu0 0.0
    %1666 = vmatprep.subr.mxu0 0.0
    %1667 = vmatpush1.msra.mxu0 0.0
    %1668 = vmatprep.subr.mxu0 0.0
    %1669 = vmatpush1.msra.mxu0 0.0
    %1670 = vmatprep.subr.mxu0 0.0
    %1671 = vmatpush1.msra.mxu0 0.0
    %1672 = vmatprep.subr.mxu0 0.0
    %1673 = vmatpush1.msra.mxu0 0.0
    %1674 = vmatprep.subr.mxu0 0.0
    %1675 = vmatpush1.msra.mxu0 0.0
    %1676 = vmatprep.subr.mxu0 0.0
    %1677 = vmatpush1.msra.mxu0 0.0
    %1678 = vmatprep.subr.mxu0 0.0
    %1679 = vmatpush1.msra.mxu0 0.0
    %1680 = vmatprep.subr.mxu0 0.0
    %1681 = vmatpush1.msra.mxu0 0.0
    %1682 = vmatprep.subr.mxu0 0.0
    %1683 = vmatpush1.msra.mxu0 0.0
    %1684 = vmatprep.subr.mxu0 0.0
    %1685 = vmatpush1.msra.mxu0 0.0
    %1686 = vmatprep.subr.mxu0 0.0
    %1687 = vmatpush1.msra.mxu0 0.0
    %1688 = vmatprep.mubr.f32.mxu0 0.0
    %1689 = vmatmul.mubr.f32.gmra.mrb[0].mxu0 %v1622
    %v1690 = vpop.f32.mrb[0].mxu0
    %v1691 = vadd.f32 0.0, %v1690
    %v1692 = vpop.f32.mrb[0].mxu0
    %1693 = vdwg.mxu0
    %v1694 = vadd.f32 %v1206, %v1691
    %v1695 = vxor.u32 %v1694, 2147483648
    %v1696 = vmul.f32 %v1695, 1.442695
    %v1697 = vpow.pop %v1696
    %v1698 = vadd.f32 %v1697, 1.0
    %v1699 = vrcp.pop %v1698
    %v1700 = vmul.f32 1.0, %v1699
    %v1701 = vtanh.pop %v1694
    %v1702 = vmul.f32 %v1700, %v1612
    %1704 = vrot.lane.b32.xlu0 %v1701, 64
    %v1705 = vpop.permute.xlu0 %1704
    %v1707 = vmul.f32 %v1700, %v1705
    %1709 = vrot.lane.b32.xlu0 %v1707, 32
    %v1710 = vpop.permute.xlu0 %1709
    %v1712 = vadd.f32 %v1702, %v1710
    %v1713 = vtanh.pop %v1712
    %1715 = vrot.lane.b32.xlu0 %v1713, 64
    %v1716 = vpop.permute.xlu0 %1715
    %v1718 = vmul.f32 %v1700, %v1716
    %1720 = vrot.lane.b32.xlu0 %v1718, 32
    %v1721 = vpop.permute.xlu0 %1720
    %v1722 = vsel %vm300, %v1721, 0
    %1724 = vmatprep.subr.mxu0 0.0
    %1725 = vmatpush1.msra.mxu0 %v1103
    %1726 = vmatprep.subr.mxu0 0.0
    %1727 = vmatpush1.msra.mxu0 %v1104
    %1728 = vmatprep.subr.mxu0 0.0
    %1729 = vmatpush1.msra.mxu0 %v1105
    %1730 = vmatprep.subr.mxu0 0.0
    %1731 = vmatpush1.msra.mxu0 %v1106
    %1732 = vmatprep.subr.mxu0 0.0
    %1733 = vmatpush1.msra.mxu0 0.0
    %1734 = vmatprep.subr.mxu0 0.0
    %1735 = vmatpush1.msra.mxu0 0.0
    %1736 = vmatprep.subr.mxu0 0.0
    %1737 = vmatpush1.msra.mxu0 0.0
    %1738 = vmatprep.subr.mxu0 0.0
    %1739 = vmatpush1.msra.mxu0 0.0
    %1740 = vmatprep.subr.mxu0 0.0
    %1741 = vmatpush1.msra.mxu0 0.0
    %1742 = vmatprep.subr.mxu0 0.0
    %1743 = vmatpush1.msra.mxu0 0.0
    %1744 = vmatprep.subr.mxu0 0.0
    %1745 = vmatpush1.msra.mxu0 0.0
    %1746 = vmatprep.subr.mxu0 0.0
    %1747 = vmatpush1.msra.mxu0 0.0
    %1748 = vmatprep.subr.mxu0 0.0
    %1749 = vmatpush1.msra.mxu0 0.0
    %1750 = vmatprep.subr.mxu0 0.0
    %1751 = vmatpush1.msra.mxu0 0.0
    %1752 = vmatprep.subr.mxu0 0.0
    %1753 = vmatpush1.msra.mxu0 0.0
    %1754 = vmatprep.subr.mxu0 0.0
    %1755 = vmatpush1.msra.mxu0 0.0
    %1756 = vmatprep.subr.mxu0 0.0
    %1757 = vmatpush1.msra.mxu0 0.0
    %1758 = vmatprep.subr.mxu0 0.0
    %1759 = vmatpush1.msra.mxu0 0.0
    %1760 = vmatprep.subr.mxu0 0.0
    %1761 = vmatpush1.msra.mxu0 0.0
    %1762 = vmatprep.subr.mxu0 0.0
    %1763 = vmatpush1.msra.mxu0 0.0
    %1764 = vmatprep.subr.mxu0 0.0
    %1765 = vmatpush1.msra.mxu0 0.0
    %1766 = vmatprep.subr.mxu0 0.0
    %1767 = vmatpush1.msra.mxu0 0.0
    %1768 = vmatprep.subr.mxu0 0.0
    %1769 = vmatpush1.msra.mxu0 0.0
    %1770 = vmatprep.subr.mxu0 0.0
    %1771 = vmatpush1.msra.mxu0 0.0
    %1772 = vmatprep.subr.mxu0 0.0
    %1773 = vmatpush1.msra.mxu0 0.0
    %1774 = vmatprep.subr.mxu0 0.0
    %1775 = vmatpush1.msra.mxu0 0.0
    %1776 = vmatprep.subr.mxu0 0.0
    %1777 = vmatpush1.msra.mxu0 0.0
    %1778 = vmatprep.subr.mxu0 0.0
    %1779 = vmatpush1.msra.mxu0 0.0
    %1780 = vmatprep.subr.mxu0 0.0
    %1781 = vmatpush1.msra.mxu0 0.0
    %1782 = vmatprep.subr.mxu0 0.0
    %1783 = vmatpush1.msra.mxu0 0.0
    %1784 = vmatprep.subr.mxu0 0.0
    %1785 = vmatpush1.msra.mxu0 0.0
    %1786 = vmatprep.subr.mxu0 0.0
    %1787 = vmatpush1.msra.mxu0 0.0
    %1788 = vmatprep.mubr.f32.mxu0 0.0
    %1789 = vmatmul.mubr.f32.gmra.mrb[0].mxu0 %v1722
    %v1790 = vpop.f32.mrb[0].mxu0
    %v1791 = vadd.f32 0.0, %v1790
    %v1792 = vpop.f32.mrb[0].mxu0
    %1793 = vdwg.mxu0
    %v1794 = vadd.f32 %v1211, %v1791
    %v1795 = vxor.u32 %v1794, 2147483648
    %v1796 = vmul.f32 %v1795, 1.442695
    %v1797 = vpow.pop %v1796
    %v1798 = vadd.f32 %v1797, 1.0
    %v1799 = vrcp.pop %v1798
    %v1800 = vmul.f32 1.0, %v1799
    %v1801 = vtanh.pop %v1794
    %v1802 = vmul.f32 %v1800, %v1712
    %1804 = vrot.lane.b32.xlu0 %v1801, 64
    %v1805 = vpop.permute.xlu0 %1804
    %v1807 = vmul.f32 %v1800, %v1805
    %1809 = vrot.lane.b32.xlu0 %v1807, 32
    %v1810 = vpop.permute.xlu0 %1809
    %v1812 = vadd.f32 %v1802, %v1810
    %v1813 = vtanh.pop %v1812
    %1815 = vrot.lane.b32.xlu0 %v1813, 64
    %v1816 = vpop.permute.xlu0 %1815
    %v1818 = vmul.f32 %v1800, %v1816
    %1820 = vrot.lane.b32.xlu0 %v1818, 32
    %v1821 = vpop.permute.xlu0 %1820
    %v1822 = vsel %vm300, %v1821, 0
    %1824 = vmatprep.subr.mxu0 0.0
    %1825 = vmatpush1.msra.mxu0 %v1103
    %1826 = vmatprep.subr.mxu0 0.0
    %1827 = vmatpush1.msra.mxu0 %v1104
    %1828 = vmatprep.subr.mxu0 0.0
    %1829 = vmatpush1.msra.mxu0 %v1105
    %1830 = vmatprep.subr.mxu0 0.0
    %1831 = vmatpush1.msra.mxu0 %v1106
    %1832 = vmatprep.subr.mxu0 0.0
    %1833 = vmatpush1.msra.mxu0 0.0
    %1834 = vmatprep.subr.mxu0 0.0
    %1835 = vmatpush1.msra.mxu0 0.0
    %1836 = vmatprep.subr.mxu0 0.0
    %1837 = vmatpush1.msra.mxu0 0.0
    %1838 = vmatprep.subr.mxu0 0.0
    %1839 = vmatpush1.msra.mxu0 0.0
    %1840 = vmatprep.subr.mxu0 0.0
    %1841 = vmatpush1.msra.mxu0 0.0
    %1842 = vmatprep.subr.mxu0 0.0
    %1843 = vmatpush1.msra.mxu0 0.0
    %1844 = vmatprep.subr.mxu0 0.0
    %1845 = vmatpush1.msra.mxu0 0.0
    %1846 = vmatprep.subr.mxu0 0.0
    %1847 = vmatpush1.msra.mxu0 0.0
    %1848 = vmatprep.subr.mxu0 0.0
    %1849 = vmatpush1.msra.mxu0 0.0
    %1850 = vmatprep.subr.mxu0 0.0
    %1851 = vmatpush1.msra.mxu0 0.0
    %1852 = vmatprep.subr.mxu0 0.0
    %1853 = vmatpush1.msra.mxu0 0.0
    %1854 = vmatprep.subr.mxu0 0.0
    %1855 = vmatpush1.msra.mxu0 0.0
    %1856 = vmatprep.subr.mxu0 0.0
    %1857 = vmatpush1.msra.mxu0 0.0
    %1858 = vmatprep.subr.mxu0 0.0
    %1859 = vmatpush1.msra.mxu0 0.0
    %1860 = vmatprep.subr.mxu0 0.0
    %1861 = vmatpush1.msra.mxu0 0.0
    %1862 = vmatprep.subr.mxu0 0.0
    %1863 = vmatpush1.msra.mxu0 0.0
    %1864 = vmatprep.subr.mxu0 0.0
    %1865 = vmatpush1.msra.mxu0 0.0
    %1866 = vmatprep.subr.mxu0 0.0
    %1867 = vmatpush1.msra.mxu0 0.0
    %1868 = vmatprep.subr.mxu0 0.0
    %1869 = vmatpush1.msra.mxu0 0.0
    %1870 = vmatprep.subr.mxu0 0.0
    %1871 = vmatpush1.msra.mxu0 0.0
    %1872 = vmatprep.subr.mxu0 0.0
    %1873 = vmatpush1.msra.mxu0 0.0
    %1874 = vmatprep.subr.mxu0 0.0
    %1875 = vmatpush1.msra.mxu0 0.0
    %1876 = vmatprep.subr.mxu0 0.0
    %1877 = vmatpush1.msra.mxu0 0.0
    %1878 = vmatprep.subr.mxu0 0.0
    %1879 = vmatpush1.msra.mxu0 0.0
    %1880 = vmatprep.subr.mxu0 0.0
    %1881 = vmatpush1.msra.mxu0 0.0
    %1882 = vmatprep.subr.mxu0 0.0
    %1883 = vmatpush1.msra.mxu0 0.0
    %1884 = vmatprep.subr.mxu0 0.0
    %1885 = vmatpush1.msra.mxu0 0.0
    %1886 = vmatprep.subr.mxu0 0.0
    %1887 = vmatpush1.msra.mxu0 0.0
    %1888 = vmatprep.mubr.f32.mxu0 0.0
    %1889 = vmatmul.mubr.f32.gmra.mrb[0].mxu0 %v1822
    %v1890 = vpop.f32.mrb[0].mxu0
    %v1891 = vadd.f32 0.0, %v1890
    %v1892 = vpop.f32.mrb[0].mxu0
    %1893 = vdwg.mxu0
    %v1894 = vadd.f32 %v1216, %v1891
    %v1895 = vxor.u32 %v1894, 2147483648
    %v1896 = vmul.f32 %v1895, 1.442695
    %v1897 = vpow.pop %v1896
    %v1898 = vadd.f32 %v1897, 1.0
    %v1899 = vrcp.pop %v1898
    %v1900 = vmul.f32 1.0, %v1899
    %v1901 = vtanh.pop %v1894
    %v1902 = vmul.f32 %v1900, %v1812
    %1904 = vrot.lane.b32.xlu0 %v1901, 64
    %v1905 = vpop.permute.xlu0 %1904
    %v1907 = vmul.f32 %v1900, %v1905
    %1909 = vrot.lane.b32.xlu0 %v1907, 32
    %v1910 = vpop.permute.xlu0 %1909
    %v1912 = vadd.f32 %v1902, %v1910
    %v1913 = vtanh.pop %v1912
    %1915 = vrot.lane.b32.xlu0 %v1913, 64
    %v1916 = vpop.permute.xlu0 %1915
    %v1918 = vmul.f32 %v1900, %v1916
    %1920 = vrot.lane.b32.xlu0 %v1918, 32
    %v1921 = vpop.permute.xlu0 %1920
    %v1922 = vsel %vm300, %v1921, 0
    %1924 = vmatprep.subr.mxu0 0.0
    %1925 = vmatpush1.msra.mxu0 %v1103
    %1926 = vmatprep.subr.mxu0 0.0
    %1927 = vmatpush1.msra.mxu0 %v1104
    %1928 = vmatprep.subr.mxu0 0.0
    %1929 = vmatpush1.msra.mxu0 %v1105
    %1930 = vmatprep.subr.mxu0 0.0
    %1931 = vmatpush1.msra.mxu0 %v1106
    %1932 = vmatprep.subr.mxu0 0.0
    %1933 = vmatpush1.msra.mxu0 0.0
    %1934 = vmatprep.subr.mxu0 0.0
    %1935 = vmatpush1.msra.mxu0 0.0
    %1936 = vmatprep.subr.mxu0 0.0
    %1937 = vmatpush1.msra.mxu0 0.0
    %1938 = vmatprep.subr.mxu0 0.0
    %1939 = vmatpush1.msra.mxu0 0.0
    %1940 = vmatprep.subr.mxu0 0.0
    %1941 = vmatpush1.msra.mxu0 0.0
    %1942 = vmatprep.subr.mxu0 0.0
    %1943 = vmatpush1.msra.mxu0 0.0
    %1944 = vmatprep.subr.mxu0 0.0
    %1945 = vmatpush1.msra.mxu0 0.0
    %1946 = vmatprep.subr.mxu0 0.0
    %1947 = vmatpush1.msra.mxu0 0.0
    %1948 = vmatprep.subr.mxu0 0.0
    %1949 = vmatpush1.msra.mxu0 0.0
    %1950 = vmatprep.subr.mxu0 0.0
    %1951 = vmatpush1.msra.mxu0 0.0
    %1952 = vmatprep.subr.mxu0 0.0
    %1953 = vmatpush1.msra.mxu0 0.0
    %1954 = vmatprep.subr.mxu0 0.0
    %1955 = vmatpush1.msra.mxu0 0.0
    %1956 = vmatprep.subr.mxu0 0.0
    %1957 = vmatpush1.msra.mxu0 0.0
    %1958 = vmatprep.subr.mxu0 0.0
    %1959 = vmatpush1.msra.mxu0 0.0
    %1960 = vmatprep.subr.mxu0 0.0
    %1961 = vmatpush1.msra.mxu0 0.0
    %1962 = vmatprep.subr.mxu0 0.0
    %1963 = vmatpush1.msra.mxu0 0.0
    %1964 = vmatprep.subr.mxu0 0.0
    %1965 = vmatpush1.msra.mxu0 0.0
    %1966 = vmatprep.subr.mxu0 0.0
    %1967 = vmatpush1.msra.mxu0 0.0
    %1968 = vmatprep.subr.mxu0 0.0
    %1969 = vmatpush1.msra.mxu0 0.0
    %1970 = vmatprep.subr.mxu0 0.0
    %1971 = vmatpush1.msra.mxu0 0.0
    %1972 = vmatprep.subr.mxu0 0.0
    %1973 = vmatpush1.msra.mxu0 0.0
    %1974 = vmatprep.subr.mxu0 0.0
    %1975 = vmatpush1.msra.mxu0 0.0
    %1976 = vmatprep.subr.mxu0 0.0
    %1977 = vmatpush1.msra.mxu0 0.0
    %1978 = vmatprep.subr.mxu0 0.0
    %1979 = vmatpush1.msra.mxu0 0.0
    %1980 = vmatprep.subr.mxu0 0.0
    %1981 = vmatpush1.msra.mxu0 0.0
    %1982 = vmatprep.subr.mxu0 0.0
    %1983 = vmatpush1.msra.mxu0 0.0
    %1984 = vmatprep.subr.mxu0 0.0
    %1985 = vmatpush1.msra.mxu0 0.0
    %1986 = vmatprep.subr.mxu0 0.0
    %1987 = vmatpush1.msra.mxu0 0.0
    %1988 = vmatprep.mubr.f32.mxu0 0.0
    %1989 = vmatmul.mubr.f32.gmra.mrb[0].mxu0 %v1922
    %v1990 = vpop.f32.mrb[0].mxu0
    %v1991 = vadd.f32 0.0, %v1990
    %v1992 = vpop.f32.mrb[0].mxu0
    %1993 = vdwg.mxu0
    %v1994 = vadd.f32 %v1221, %v1991
    %v1995 = vxor.u32 %v1994, 2147483648
    %v1996 = vmul.f32 %v1995, 1.442695
    %v1997 = vpow.pop %v1996
    %v1998 = vadd.f32 %v1997, 1.0
    %v1999 = vrcp.pop %v1998
    %v2000 = vmul.f32 1.0, %v1999
    %v2001 = vtanh.pop %v1994
    %v2002 = vmul.f32 %v2000, %v1912
    %2004 = vrot.lane.b32.xlu0 %v2001, 64
    %v2005 = vpop.permute.xlu0 %2004
    %v2007 = vmul.f32 %v2000, %v2005
    %2009 = vrot.lane.b32.xlu0 %v2007, 32
    %v2010 = vpop.permute.xlu0 %2009
    %v2012 = vadd.f32 %v2002, %v2010
    %v2013 = vtanh.pop %v2012
    %2015 = vrot.lane.b32.xlu0 %v2013, 64
    %v2016 = vpop.permute.xlu0 %2015
    %v2018 = vmul.f32 %v2000, %v2016
    %v2019 = vld [vmem:[#allocation14] sm:$0xff]
    %v2020 = vld [vmem:[#allocation14 + $0x8] sm:$0xff]
    %v2021 = vld [vmem:[#allocation14 + $0x10] sm:$0xff]
    %v2022 = vld [vmem:[#allocation14 + $0x18] sm:$0xff]
    %v2023 = vld [vmem:[#allocation16] sm:$0x1]
    %v2025 = vlaneseq
    %v2026 = vshrl.u32 %v2025, 7
    %v2027 = vsub.s32 0, %v2026
    %v2028 = vrot.slane %v2023, %v2027
    %2031 = vrot.lane.b32.xlu0 %v2018, 32
    %v2032 = vpop.permute.xlu0 %2031
    %v2033 = vsel %vm300, %v2032, 0
    %2035 = vmatprep.subr.mxu0 0.0
    %2036 = vmatpush1.msra.mxu0 %v2019
    %2037 = vmatprep.subr.mxu0 0.0
    %2038 = vmatpush1.msra.mxu0 %v2020
    %2039 = vmatprep.subr.mxu0 0.0
    %2040 = vmatpush1.msra.mxu0 %v2021
    %2041 = vmatprep.subr.mxu0 0.0
    %2042 = vmatpush1.msra.mxu0 %v2022
    %2043 = vmatprep.subr.mxu0 0.0
    %2044 = vmatpush1.msra.mxu0 0.0
    %2045 = vmatprep.subr.mxu0 0.0
    %2046 = vmatpush1.msra.mxu0 0.0
    %2047 = vmatprep.subr.mxu0 0.0
    %2048 = vmatpush1.msra.mxu0 0.0
    %2049 = vmatprep.subr.mxu0 0.0
    %2050 = vmatpush1.msra.mxu0 0.0
    %2051 = vmatprep.subr.mxu0 0.0
    %2052 = vmatpush1.msra.mxu0 0.0
    %2053 = vmatprep.subr.mxu0 0.0
    %2054 = vmatpush1.msra.mxu0 0.0
    %2055 = vmatprep.subr.mxu0 0.0
    %2056 = vmatpush1.msra.mxu0 0.0
    %2057 = vmatprep.subr.mxu0 0.0
    %2058 = vmatpush1.msra.mxu0 0.0
    %2059 = vmatprep.subr.mxu0 0.0
    %2060 = vmatpush1.msra.mxu0 0.0
    %2061 = vmatprep.subr.mxu0 0.0
    %2062 = vmatpush1.msra.mxu0 0.0
    %2063 = vmatprep.subr.mxu0 0.0
    %2064 = vmatpush1.msra.mxu0 0.0
    %2065 = vmatprep.subr.mxu0 0.0
    %2066 = vmatpush1.msra.mxu0 0.0
    %2067 = vmatprep.subr.mxu0 0.0
    %2068 = vmatpush1.msra.mxu0 0.0
    %2069 = vmatprep.subr.mxu0 0.0
    %2070 = vmatpush1.msra.mxu0 0.0
    %2071 = vmatprep.subr.mxu0 0.0
    %2072 = vmatpush1.msra.mxu0 0.0
    %2073 = vmatprep.subr.mxu0 0.0
    %2074 = vmatpush1.msra.mxu0 0.0
    %2075 = vmatprep.subr.mxu0 0.0
    %2076 = vmatpush1.msra.mxu0 0.0
    %2077 = vmatprep.subr.mxu0 0.0
    %2078 = vmatpush1.msra.mxu0 0.0
    %2079 = vmatprep.subr.mxu0 0.0
    %2080 = vmatpush1.msra.mxu0 0.0
    %2081 = vmatprep.subr.mxu0 0.0
    %2082 = vmatpush1.msra.mxu0 0.0
    %2083 = vmatprep.subr.mxu0 0.0
    %2084 = vmatpush1.msra.mxu0 0.0
    %2085 = vmatprep.subr.mxu0 0.0
    %2086 = vmatpush1.msra.mxu0 0.0
    %2087 = vmatprep.subr.mxu0 0.0
    %2088 = vmatpush1.msra.mxu0 0.0
    %2089 = vmatprep.subr.mxu0 0.0
    %2090 = vmatpush1.msra.mxu0 0.0
    %2091 = vmatprep.subr.mxu0 0.0
    %2092 = vmatpush1.msra.mxu0 0.0
    %2093 = vmatprep.subr.mxu0 0.0
    %2094 = vmatpush1.msra.mxu0 0.0
    %2095 = vmatprep.subr.mxu0 0.0
    %2096 = vmatpush1.msra.mxu0 0.0
    %2097 = vmatprep.subr.mxu0 0.0
    %2098 = vmatpush1.msra.mxu0 0.0
    %2099 = vmatprep.mubr.f32.mxu0 0.0
    %2100 = vmatmul.mubr.f32.gmra.mrb[0].mxu0 %v2033
    %v2101 = vpop.f32.mrb[0].mxu0
    %v2102 = vadd.f32 %v2028, %v2101
    %v2103 = vpop.f32.mrb[0].mxu0
    %2104 = vdwg.mxu0
    %vm2105 = vcmask 31744
    %2106 = vst.msk [vmem:[#allocation17] sm:$0xff] %vm2105, %v2102
    // Predicated region
    $region74: #{tpu_custom_call.1} parent=1 // pred_check
      _
    $region75: #{tpu_custom_call.1} parent=1 // pred_check_branch
      %2108 = sbr.rel (0) target = $region77
    $region76: #{tpu_custom_call.1} parent=1 // pred_region
      %s2110 = ssub.s32 128, 128
      %2111 = vsyncadd [#allocation4], %s2110
      %s2113 = sshll.u32 [#allocation17], 4
      %s2114 = int_to_ptr.vmem [resolvable:$true] %s2113
      %2116 = dma.vmem_to_hbm [thread:$0]  %s2114, 128, %s9, [#allocation4]
    $region77: #{tpu_custom_call.1} parent=1 // pred_fallthru
      _
    // Predicated region
    $region78: #{tpu_custom_call.1} parent=1 // pred_check
      _
    $region79: #{tpu_custom_call.1} parent=1 // pred_check_branch
      %2118 = sbr.rel (0) target = $region81
    $region80: #{tpu_custom_call.1} parent=1 // pred_region
      %2119 = dma.done [#allocation4], 128
    $region81: #{tpu_custom_call.1} parent=1 // pred_fallthru
      _
    %2120 = vsyncpa [#allocation3], 1
    %2121 = vsyncpa [#allocation6], 1
    %2122 = vsyncpa [#allocation9], 1
    %2123 = vsyncpa [#allocation12], 1
    %2124 = vsyncpa [#allocation15], 1
    %2125 = vsyncpa [#allocation4], 1

</llo_original>
